<compile_context>
chip_gen: v6e
topology: v6e:2x2x1
jax: 0.10.0
libtpu: 0.0.40
codegen_flags: <defaults>
</compile_context>

<pallas_src>
import functools

import jax
import jax.numpy as jnp
from jax.experimental import pallas as pl
from jax.experimental.pallas import tpu as pltpu


def _yolo_decode_kernel(grid_ref, p_ref, *refs, stride, anchors, fused, with_p):
    """Decode one (na, no, TS) tile of raw YOLO predictions.

    grid_ref : VMEM (2, TS) f32   precomputed (x, y) cell offsets for this S-tile
    p_ref    : VMEM (na, no, TS)  raw network outputs (lane-dense spatial tile)

    fused=True  -> refs = (io_ref (na,TS,no) f32 [, pperm_ref (na,TS,no)],
                           tmp_ref (na,no,TS) f32 scratch)
                   outputs are written already transposed to the final layout.
    fused=False -> refs = (io_ref (na,no,TS) f32,)   lane-dense output,
                   transpose handled outside by XLA.
    """
    if fused:
        if with_p:
            io_ref, pperm_ref, tmp_ref = refs
        else:
            io_ref, tmp_ref = refs
            pperm_ref = None
        dst = tmp_ref
    else:
        (io_ref,) = refs
        pperm_ref = None
        dst = io_ref

    na = p_ref.shape[0]
    s = jnp.float32(stride)
    g = grid_ref[...]                                            # (2, TS) f32

    # --- per-row-group decode: no slab-wide f32 copy / sigmoid temporaries ---
    # xy rows: (sigmoid(txy) + grid_offset) * stride
    dst[:, 0:2, :] = (jax.nn.sigmoid(p_ref[:, 0:2, :].astype(jnp.float32)) + g) * s
    # wh rows: exp(twh) * anchor   (anchors are original pixels == anchor_vec*stride);
    # anchors are compile-time scalars, so this is a plain scalar multiply per row.
    for a, (aw, ah) in enumerate(anchors):
        dst[a, 2:3, :] = jnp.exp(p_ref[a, 2:3, :].astype(jnp.float32)) * jnp.float32(aw)
        dst[a, 3:4, :] = jnp.exp(p_ref[a, 3:4, :].astype(jnp.float32)) * jnp.float32(ah)
    # objectness + class scores
    dst[:, 4:, :] = jax.nn.sigmoid(p_ref[:, 4:, :].astype(jnp.float32))

    if fused:
        # One aligned (no, TS) -> (TS, no) XLU transpose per anchor writes the output
        # directly in the final (bs, na, ny*nx, no) layout, removing the separate
        # full-HBM XLA transpose pass over io (and over p when with_p).
        for a in range(na):
            io_ref[a] = tmp_ref[a].T
            if with_p:
                pperm_ref[a] = p_ref[a].astype(jnp.float32).T.astype(pperm_ref.dtype)


def _pick_spatial_tile(s_len, max_tile):
    """Largest multiple of 128 that divides s_len and is <= max_tile, else s_len."""
    ts = s_len
    t = 128
    while t <= min(s_len, max_tile):
        if s_len % t == 0:
            ts = t
        t += 128
    return ts


def yolo_layer_forward(p, anchors, stride, *, with_p=True, max_tile=1024,
                       fuse_output_transpose=None):
    """Inference forward of YOLOLayer (training=False, ONNX_EXPORT=False, ASFF=False).

    p       : (bs, na*no, ny, nx)   raw conv output (f32 or bf16; kernel upcasts)
    anchors : (na, 2) array-like, original-pixel anchors (static hyperparameters)
    stride  : python scalar

    Returns (io, p_perm) with io: (bs, na*ny*nx, no) f32 and
    p_perm: (bs, na, ny, nx, no) in p.dtype — matching the PyTorch module.
    Pass with_p=False at pure inference to skip materializing p_perm.
    """
    # TODO(synk): training / ONNX_EXPORT / ASFF branches of the PyTorch module are not
    # implemented (ASFF needs bilinear F.interpolate); this is the plain inference path.
    bs, c, ny, nx = p.shape
    anchors_host = tuple(tuple(float(v) for v in row)
                         for row in jax.device_get(jnp.asarray(anchors, jnp.float32)))
    na = len(anchors_host)
    no = c // na
    s_len = ny * nx
    ts = _pick_spatial_tile(s_len, max_tile)
    n_s = s_len // ts

    if fuse_output_transpose is None:
        # In-kernel (no, TS)->(TS, no) transposes want 8-sublane / 128-lane alignment;
        # otherwise fall back to lane-dense output + XLA transpose (still correct).
        fuse_output_transpose = (no % 8 == 0) and (ts % 128 == 0)
    fused = bool(fuse_output_transpose)

    # Pure view reshape (NCHW contiguous): lane-dense (bs, na, no, S).
    p4 = p.reshape(bs, na, no, s_len)

    # Integer-exact cell offsets, x = s % nx, y = s // nx, sliced per S-tile by BlockSpec.
    idx = jnp.arange(s_len, dtype=jnp.int32)
    grid_xy = jnp.stack([idx % nx, idx // nx], axis=0).astype(jnp.float32)   # (2, S)

    kernel = functools.partial(_yolo_decode_kernel, stride=float(stride),
                               anchors=anchors_host, fused=fused, with_p=with_p)

    in_specs = [
        pl.BlockSpec((2, ts), lambda b, si: (0, si)),                    # grid offsets
        pl.BlockSpec((None, na, no, ts), lambda b, si: (b, 0, 0, si)),   # raw predictions
    ]
    if fused:
        out_shape = [jax.ShapeDtypeStruct((bs, na, s_len, no), jnp.float32)]
        out_specs = [pl.BlockSpec((None, na, ts, no), lambda b, si: (b, 0, si, 0))]
        if with_p:
            out_shape.append(jax.ShapeDtypeStruct((bs, na, s_len, no), p.dtype))
            out_specs.append(pl.BlockSpec((None, na, ts, no), lambda b, si: (b, 0, si, 0)))
        scratch_shapes = [pltpu.VMEM((na, no, ts), jnp.float32)]
    else:
        out_shape = [jax.ShapeDtypeStruct((bs, na, no, s_len), jnp.float32)]
        out_specs = [pl.BlockSpec((None, na, no, ts), lambda b, si: (b, 0, 0, si))]
        scratch_shapes = []

    outs = pl.pallas_call(
        kernel,
        out_shape=tuple(out_shape),
        grid_spec=pltpu.PrefetchScalarGridSpec(
            num_scalar_prefetch=0,
            grid=(bs, n_s),
            in_specs=in_specs,
            out_specs=tuple(out_specs),
            scratch_shapes=tuple(scratch_shapes)),
        compiler_params=pltpu.CompilerParams(
            dimension_semantics=("parallel", "parallel"),
            vmem_limit_bytes=32 * 1024 * 1024),
    )(grid_xy, p4)

    if fused:
        io = outs[0].reshape(bs, na * s_len, no)                 # free view
        if with_p:
            p_perm = outs[1].reshape(bs, na, ny, nx, no)         # free view
            return io, p_perm
        return io

    # Fallback layout glue (only when no / TS are not (8,128)-aligned).
    io = jnp.transpose(outs[0].reshape(bs, na, no, ny, nx),
                       (0, 1, 3, 4, 2)).reshape(bs, -1, no)
    if with_p:
        p_perm = jnp.transpose(p.reshape(bs, na, no, ny, nx), (0, 1, 3, 4, 2))
        return io, p_perm
    return io


if __name__ == "__main__":
    key = jax.random.PRNGKey(0)

    # Module config (deterministic, in-script): nc=3 classes, 3 anchors, stride=16.
    bs, nc = 2, 3
    anchors = ((10.0, 13.0), (16.0, 30.0), (33.0, 23.0))
    na = len(anchors)
    no = nc + 5                      # 8
    ny = nx = 16
    stride = 16

    p = jax.random.normal(key, (bs, na * no, ny, nx), dtype=jnp.float32)

    io, p_out = yolo_layer_forward(p, anchors, stride)
    io = jax.block_until_ready(io)
    p_out = jax.block_until_ready(p_out)

    # Pure-JAX reference (mirrors the PyTorch inference branch).
    anchors_arr = jnp.asarray(anchors, dtype=jnp.float32)
    p5_ref = p.reshape(bs, na, no, ny, nx).transpose(0, 1, 3, 4, 2)   # (bs,na,ny,nx,no)
    gy, gx = jnp.meshgrid(jnp.arange(ny, dtype=jnp.float32),
                          jnp.arange(nx, dtype=jnp.float32), indexing="ij")
    grid = jnp.stack([gx, gy], axis=-1)[None, None]                    # (1,1,ny,nx,2)
    xy = (jax.nn.sigmoid(p5_ref[..., :2]) + grid) * stride
    wh = jnp.exp(p5_ref[..., 2:4]) * anchors_arr.reshape(1, na, 1, 1, 2)
    rest = jax.nn.sigmoid(p5_ref[..., 4:])
    io_ref = jnp.concatenate([xy, wh, rest], axis=-1).reshape(bs, -1, no)

    assert io.shape == (bs, na * ny * nx, no)
    assert p_out.shape == (bs, na, ny, nx, no)
    assert jnp.allclose(p_out, p5_ref)
    assert jnp.allclose(io, io_ref, atol=1e-5, rtol=1e-5)

    print("KERNEL_OK")
</pallas_src>

<mosaic_0001>
module attributes {stable_mosaic.version = 11 : i64} {
  func.func @_yolo_decode_kernel(%arg0: i32, %arg1: i32, %arg2: memref<2x256xf32, #tpu.memory_space<vmem>>, %arg3: memref<1x3x8x256xf32, #tpu.memory_space<vmem>>, %arg4: memref<1x3x256x8xf32, #tpu.memory_space<vmem>>, %arg5: memref<1x3x256x8xf32, #tpu.memory_space<vmem>>, %arg6: memref<3x8x256xf32, #tpu.memory_space<vmem>>) attributes {dimension_semantics = [#tpu.dimension_semantics<parallel>, #tpu.dimension_semantics<parallel>], iteration_bounds = array<i64: 2, 1>, scalar_prefetch = 0 : i64, scratch_operands = 1 : i64, tpu.core_type = #tpu.core_type<tc>, window_params = [{transform_indices = @transform_0, window_bounds = array<i64: 2, 256>}, {transform_indices = @transform_1, window_bounds = array<i64: 1, 3, 8, 256>}, {transform_indices = @transform_2, window_bounds = array<i64: 1, 3, 256, 8>}, {transform_indices = @transform_3, window_bounds = array<i64: 1, 3, 256, 8>}]} {
    %c0 = arith.constant 0 : index
    %c0_0 = arith.constant 0 : index
    %0 = vector.load %arg2[%c0, %c0_0] : memref<2x256xf32, #tpu.memory_space<vmem>>, vector<2x256xf32>
    %c0_1 = arith.constant 0 : index
    %c0_2 = arith.constant 0 : index
    %c0_3 = arith.constant 0 : index
    %c0_4 = arith.constant 0 : index
    %1 = vector.load %arg3[%c0_1, %c0_2, %c0_3, %c0_4] : memref<1x3x8x256xf32, #tpu.memory_space<vmem>>, vector<1x3x2x256xf32>
    %2 = vector.shape_cast %1 : vector<1x3x2x256xf32> to vector<3x2x256xf32>
    %3 = arith.negf %2 : vector<3x2x256xf32>
    %4 = math.exp %3 : vector<3x2x256xf32>
    %cst = arith.constant 1.000000e+00 : f32
    %5 = vector.broadcast %cst : f32 to vector<3x2x256xf32>
    %6 = arith.addf %5, %4 : vector<3x2x256xf32>
    %7 = arith.divf %5, %6 : vector<3x2x256xf32>
    %8 = vector.shape_cast %0 : vector<2x256xf32> to vector<1x2x256xf32>
    %9 = vector.broadcast %8 : vector<1x2x256xf32> to vector<3x2x256xf32>
    %10 = arith.addf %7, %9 : vector<3x2x256xf32>
    %cst_5 = arith.constant 1.600000e+01 : f32
    %11 = vector.broadcast %cst_5 : f32 to vector<3x2x256xf32>
    %12 = arith.mulf %10, %11 : vector<3x2x256xf32>
    %c0_6 = arith.constant 0 : index
    %c0_7 = arith.constant 0 : index
    %c0_8 = arith.constant 0 : index
    %13 = vector.load %arg6[%c0_6, %c0_7, %c0_8] : memref<3x8x256xf32, #tpu.memory_space<vmem>>, vector<3x2x256xf32>
    tpu.vector_store %arg6[%c0_6, %c0_7, %c0_8], %12 {strides = array<i32>} : memref<3x8x256xf32, #tpu.memory_space<vmem>>, vector<3x2x256xf32>,
    %c0_9 = arith.constant 0 : index
    %c0_10 = arith.constant 0 : index
    %c2 = arith.constant 2 : index
    %c0_11 = arith.constant 0 : index
    %14 = vector.load %arg3[%c0_9, %c0_10, %c2, %c0_11] : memref<1x3x8x256xf32, #tpu.memory_space<vmem>>, vector<1x1x1x256xf32>
    %15 = vector.shape_cast %14 : vector<1x1x1x256xf32> to vector<1x256xf32>
    %16 = math.exp %15 : vector<1x256xf32>
    %cst_12 = arith.constant 1.000000e+01 : f32
    %17 = vector.broadcast %cst_12 : f32 to vector<1x256xf32>
    %18 = arith.mulf %16, %17 : vector<1x256xf32>
    %c0_13 = arith.constant 0 : index
    %c2_14 = arith.constant 2 : index
    %c0_15 = arith.constant 0 : index
    %19 = vector.load %arg6[%c0_13, %c2_14, %c0_15] : memref<3x8x256xf32, #tpu.memory_space<vmem>>, vector<1x1x256xf32>
    %20 = vector.shape_cast %19 : vector<1x1x256xf32> to vector<1x256xf32>
    %21 = vector.shape_cast %18 : vector<1x256xf32> to vector<1x1x256xf32>
    tpu.vector_store %arg6[%c0_13, %c2_14, %c0_15], %21 {strides = array<i32>} : memref<3x8x256xf32, #tpu.memory_space<vmem>>, vector<1x1x256xf32>,
    %c0_16 = arith.constant 0 : index
    %c0_17 = arith.constant 0 : index
    %c3 = arith.constant 3 : index
    %c0_18 = arith.constant 0 : index
    %22 = vector.load %arg3[%c0_16, %c0_17, %c3, %c0_18] : memref<1x3x8x256xf32, #tpu.memory_space<vmem>>, vector<1x1x1x256xf32>
    %23 = vector.shape_cast %22 : vector<1x1x1x256xf32> to vector<1x256xf32>
    %24 = math.exp %23 : vector<1x256xf32>
    %cst_19 = arith.constant 1.300000e+01 : f32
    %25 = vector.broadcast %cst_19 : f32 to vector<1x256xf32>
    %26 = arith.mulf %24, %25 : vector<1x256xf32>
    %c0_20 = arith.constant 0 : index
    %c3_21 = arith.constant 3 : index
    %c0_22 = arith.constant 0 : index
    %27 = vector.load %arg6[%c0_20, %c3_21, %c0_22] : memref<3x8x256xf32, #tpu.memory_space<vmem>>, vector<1x1x256xf32>
    %28 = vector.shape_cast %27 : vector<1x1x256xf32> to vector<1x256xf32>
    %29 = vector.shape_cast %26 : vector<1x256xf32> to vector<1x1x256xf32>
    tpu.vector_store %arg6[%c0_20, %c3_21, %c0_22], %29 {strides = array<i32>} : memref<3x8x256xf32, #tpu.memory_space<vmem>>, vector<1x1x256xf32>,
    %c0_23 = arith.constant 0 : index
    %c1 = arith.constant 1 : index
    %c2_24 = arith.constant 2 : index
    %c0_25 = arith.constant 0 : index
    %30 = vector.load %arg3[%c0_23, %c1, %c2_24, %c0_25] : memref<1x3x8x256xf32, #tpu.memory_space<vmem>>, vector<1x1x1x256xf32>
    %31 = vector.shape_cast %30 : vector<1x1x1x256xf32> to vector<1x256xf32>
    %32 = math.exp %31 : vector<1x256xf32>
    %cst_26 = arith.constant 1.600000e+01 : f32
    %33 = vector.broadcast %cst_26 : f32 to vector<1x256xf32>
    %34 = arith.mulf %32, %33 : vector<1x256xf32>
    %c1_27 = arith.constant 1 : index
    %c2_28 = arith.constant 2 : index
    %c0_29 = arith.constant 0 : index
    %35 = vector.load %arg6[%c1_27, %c2_28, %c0_29] : memref<3x8x256xf32, #tpu.memory_space<vmem>>, vector<1x1x256xf32>
    %36 = vector.shape_cast %35 : vector<1x1x256xf32> to vector<1x256xf32>
    %37 = vector.shape_cast %34 : vector<1x256xf32> to vector<1x1x256xf32>
    tpu.vector_store %arg6[%c1_27, %c2_28, %c0_29], %37 {strides = array<i32>} : memref<3x8x256xf32, #tpu.memory_space<vmem>>, vector<1x1x256xf32>,
    %c0_30 = arith.constant 0 : index
    %c1_31 = arith.constant 1 : index
    %c3_32 = arith.constant 3 : index
    %c0_33 = arith.constant 0 : index
    %38 = vector.load %arg3[%c0_30, %c1_31, %c3_32, %c0_33] : memref<1x3x8x256xf32, #tpu.memory_space<vmem>>, vector<1x1x1x256xf32>
    %39 = vector.shape_cast %38 : vector<1x1x1x256xf32> to vector<1x256xf32>
    %40 = math.exp %39 : vector<1x256xf32>
    %cst_34 = arith.constant 3.000000e+01 : f32
    %41 = vector.broadcast %cst_34 : f32 to vector<1x256xf32>
    %42 = arith.mulf %40, %41 : vector<1x256xf32>
    %c1_35 = arith.constant 1 : index
    %c3_36 = arith.constant 3 : index
    %c0_37 = arith.constant 0 : index
    %43 = vector.load %arg6[%c1_35, %c3_36, %c0_37] : memref<3x8x256xf32, #tpu.memory_space<vmem>>, vector<1x1x256xf32>
    %44 = vector.shape_cast %43 : vector<1x1x256xf32> to vector<1x256xf32>
    %45 = vector.shape_cast %42 : vector<1x256xf32> to vector<1x1x256xf32>
    tpu.vector_store %arg6[%c1_35, %c3_36, %c0_37], %45 {strides = array<i32>} : memref<3x8x256xf32, #tpu.memory_space<vmem>>, vector<1x1x256xf32>,
    %c0_38 = arith.constant 0 : index
    %c2_39 = arith.constant 2 : index
    %c2_40 = arith.constant 2 : index
    %c0_41 = arith.constant 0 : index
    %46 = vector.load %arg3[%c0_38, %c2_39, %c2_40, %c0_41] : memref<1x3x8x256xf32, #tpu.memory_space<vmem>>, vector<1x1x1x256xf32>
    %47 = vector.shape_cast %46 : vector<1x1x1x256xf32> to vector<1x256xf32>
    %48 = math.exp %47 : vector<1x256xf32>
    %cst_42 = arith.constant 3.300000e+01 : f32
    %49 = vector.broadcast %cst_42 : f32 to vector<1x256xf32>
    %50 = arith.mulf %48, %49 : vector<1x256xf32>
    %c2_43 = arith.constant 2 : index
    %c2_44 = arith.constant 2 : index
    %c0_45 = arith.constant 0 : index
    %51 = vector.load %arg6[%c2_43, %c2_44, %c0_45] : memref<3x8x256xf32, #tpu.memory_space<vmem>>, vector<1x1x256xf32>
    %52 = vector.shape_cast %51 : vector<1x1x256xf32> to vector<1x256xf32>
    %53 = vector.shape_cast %50 : vector<1x256xf32> to vector<1x1x256xf32>
    tpu.vector_store %arg6[%c2_43, %c2_44, %c0_45], %53 {strides = array<i32>} : memref<3x8x256xf32, #tpu.memory_space<vmem>>, vector<1x1x256xf32>,
    %c0_46 = arith.constant 0 : index
    %c2_47 = arith.constant 2 : index
    %c3_48 = arith.constant 3 : index
    %c0_49 = arith.constant 0 : index
    %54 = vector.load %arg3[%c0_46, %c2_47, %c3_48, %c0_49] : memref<1x3x8x256xf32, #tpu.memory_space<vmem>>, vector<1x1x1x256xf32>
    %55 = vector.shape_cast %54 : vector<1x1x1x256xf32> to vector<1x256xf32>
    %56 = math.exp %55 : vector<1x256xf32>
    %cst_50 = arith.constant 2.300000e+01 : f32
    %57 = vector.broadcast %cst_50 : f32 to vector<1x256xf32>
    %58 = arith.mulf %56, %57 : vector<1x256xf32>
    %c2_51 = arith.constant 2 : index
    %c3_52 = arith.constant 3 : index
    %c0_53 = arith.constant 0 : index
    %59 = vector.load %arg6[%c2_51, %c3_52, %c0_53] : memref<3x8x256xf32, #tpu.memory_space<vmem>>, vector<1x1x256xf32>
    %60 = vector.shape_cast %59 : vector<1x1x256xf32> to vector<1x256xf32>
    %61 = vector.shape_cast %58 : vector<1x256xf32> to vector<1x1x256xf32>
    tpu.vector_store %arg6[%c2_51, %c3_52, %c0_53], %61 {strides = array<i32>} : memref<3x8x256xf32, #tpu.memory_space<vmem>>, vector<1x1x256xf32>,
    %c0_54 = arith.constant 0 : index
    %c0_55 = arith.constant 0 : index
    %c4 = arith.constant 4 : index
    %c0_56 = arith.constant 0 : index
    %62 = vector.load %arg3[%c0_54, %c0_55, %c4, %c0_56] : memref<1x3x8x256xf32, #tpu.memory_space<vmem>>, vector<1x3x4x256xf32>
    %63 = vector.shape_cast %62 : vector<1x3x4x256xf32> to vector<3x4x256xf32>
    %64 = arith.negf %63 : vector<3x4x256xf32>
    %65 = math.exp %64 : vector<3x4x256xf32>
    %cst_57 = arith.constant 1.000000e+00 : f32
    %66 = vector.broadcast %cst_57 : f32 to vector<3x4x256xf32>
    %67 = arith.addf %66, %65 : vector<3x4x256xf32>
    %68 = arith.divf %66, %67 : vector<3x4x256xf32>
    %c0_58 = arith.constant 0 : index
    %c4_59 = arith.constant 4 : index
    %c0_60 = arith.constant 0 : index
    %69 = vector.load %arg6[%c0_58, %c4_59, %c0_60] : memref<3x8x256xf32, #tpu.memory_space<vmem>>, vector<3x4x256xf32>
    tpu.vector_store %arg6[%c0_58, %c4_59, %c0_60], %68 {strides = array<i32>} : memref<3x8x256xf32, #tpu.memory_space<vmem>>, vector<3x4x256xf32>,
    %c0_61 = arith.constant 0 : index
    %c0_62 = arith.constant 0 : index
    %c0_63 = arith.constant 0 : index
    %70 = vector.load %arg6[%c0_61, %c0_62, %c0_63] : memref<3x8x256xf32, #tpu.memory_space<vmem>>, vector<1x8x256xf32>
    %71 = vector.shape_cast %70 : vector<1x8x256xf32> to vector<8x256xf32>
    %72 = tpu.transpose %71, [1, 0] : vector<8x256xf32> -> vector<256x8xf32>
    %c0_64 = arith.constant 0 : index
    %c0_65 = arith.constant 0 : index
    %c0_66 = arith.constant 0 : index
    %c0_67 = arith.constant 0 : index
    %73 = vector.load %arg4[%c0_64, %c0_65, %c0_66, %c0_67] : memref<1x3x256x8xf32, #tpu.memory_space<vmem>>, vector<1x1x256x8xf32>
    %74 = vector.shape_cast %73 : vector<1x1x256x8xf32> to vector<256x8xf32>
    %75 = vector.shape_cast %72 : vector<256x8xf32> to vector<1x1x256x8xf32>
    tpu.vector_store %arg4[%c0_64, %c0_65, %c0_66, %c0_67], %75 {strides = array<i32>} : memref<1x3x256x8xf32, #tpu.memory_space<vmem>>, vector<1x1x256x8xf32>,
    %c0_68 = arith.constant 0 : index
    %c0_69 = arith.constant 0 : index
    %c0_70 = arith.constant 0 : index
    %c0_71 = arith.constant 0 : index
    %76 = vector.load %arg3[%c0_68, %c0_69, %c0_70, %c0_71] : memref<1x3x8x256xf32, #tpu.memory_space<vmem>>, vector<1x1x8x256xf32>
    %77 = vector.shape_cast %76 : vector<1x1x8x256xf32> to vector<8x256xf32>
    %78 = tpu.transpose %77, [1, 0] : vector<8x256xf32> -> vector<256x8xf32>
    %c0_72 = arith.constant 0 : index
    %c0_73 = arith.constant 0 : index
    %c0_74 = arith.constant 0 : index
    %c0_75 = arith.constant 0 : index
    %79 = vector.load %arg5[%c0_72, %c0_73, %c0_74, %c0_75] : memref<1x3x256x8xf32, #tpu.memory_space<vmem>>, vector<1x1x256x8xf32>
    %80 = vector.shape_cast %79 : vector<1x1x256x8xf32> to vector<256x8xf32>
    %81 = vector.shape_cast %78 : vector<256x8xf32> to vector<1x1x256x8xf32>
    tpu.vector_store %arg5[%c0_72, %c0_73, %c0_74, %c0_75], %81 {strides = array<i32>} : memref<1x3x256x8xf32, #tpu.memory_space<vmem>>, vector<1x1x256x8xf32>,
    %c1_76 = arith.constant 1 : index
    %c0_77 = arith.constant 0 : index
    %c0_78 = arith.constant 0 : index
    %82 = vector.load %arg6[%c1_76, %c0_77, %c0_78] : memref<3x8x256xf32, #tpu.memory_space<vmem>>, vector<1x8x256xf32>
    %83 = vector.shape_cast %82 : vector<1x8x256xf32> to vector<8x256xf32>
    %84 = tpu.transpose %83, [1, 0] : vector<8x256xf32> -> vector<256x8xf32>
    %c0_79 = arith.constant 0 : index
    %c1_80 = arith.constant 1 : index
    %c0_81 = arith.constant 0 : index
    %c0_82 = arith.constant 0 : index
    %85 = vector.load %arg4[%c0_79, %c1_80, %c0_81, %c0_82] : memref<1x3x256x8xf32, #tpu.memory_space<vmem>>, vector<1x1x256x8xf32>
    %86 = vector.shape_cast %85 : vector<1x1x256x8xf32> to vector<256x8xf32>
    %87 = vector.shape_cast %84 : vector<256x8xf32> to vector<1x1x256x8xf32>
    tpu.vector_store %arg4[%c0_79, %c1_80, %c0_81, %c0_82], %87 {strides = array<i32>} : memref<1x3x256x8xf32, #tpu.memory_space<vmem>>, vector<1x1x256x8xf32>,
    %c0_83 = arith.constant 0 : index
    %c1_84 = arith.constant 1 : index
    %c0_85 = arith.constant 0 : index
    %c0_86 = arith.constant 0 : index
    %88 = vector.load %arg3[%c0_83, %c1_84, %c0_85, %c0_86] : memref<1x3x8x256xf32, #tpu.memory_space<vmem>>, vector<1x1x8x256xf32>
    %89 = vector.shape_cast %88 : vector<1x1x8x256xf32> to vector<8x256xf32>
    %90 = tpu.transpose %89, [1, 0] : vector<8x256xf32> -> vector<256x8xf32>
    %c0_87 = arith.constant 0 : index
    %c1_88 = arith.constant 1 : index
    %c0_89 = arith.constant 0 : index
    %c0_90 = arith.constant 0 : index
    %91 = vector.load %arg5[%c0_87, %c1_88, %c0_89, %c0_90] : memref<1x3x256x8xf32, #tpu.memory_space<vmem>>, vector<1x1x256x8xf32>
    %92 = vector.shape_cast %91 : vector<1x1x256x8xf32> to vector<256x8xf32>
    %93 = vector.shape_cast %90 : vector<256x8xf32> to vector<1x1x256x8xf32>
    tpu.vector_store %arg5[%c0_87, %c1_88, %c0_89, %c0_90], %93 {strides = array<i32>} : memref<1x3x256x8xf32, #tpu.memory_space<vmem>>, vector<1x1x256x8xf32>,
    %c2_91 = arith.constant 2 : index
    %c0_92 = arith.constant 0 : index
    %c0_93 = arith.constant 0 : index
    %94 = vector.load %arg6[%c2_91, %c0_92, %c0_93] : memref<3x8x256xf32, #tpu.memory_space<vmem>>, vector<1x8x256xf32>
    %95 = vector.shape_cast %94 : vector<1x8x256xf32> to vector<8x256xf32>
    %96 = tpu.transpose %95, [1, 0] : vector<8x256xf32> -> vector<256x8xf32>
    %c0_94 = arith.constant 0 : index
    %c2_95 = arith.constant 2 : index
    %c0_96 = arith.constant 0 : index
    %c0_97 = arith.constant 0 : index
    %97 = vector.load %arg4[%c0_94, %c2_95, %c0_96, %c0_97] : memref<1x3x256x8xf32, #tpu.memory_space<vmem>>, vector<1x1x256x8xf32>
    %98 = vector.shape_cast %97 : vector<1x1x256x8xf32> to vector<256x8xf32>
    %99 = vector.shape_cast %96 : vector<256x8xf32> to vector<1x1x256x8xf32>
    tpu.vector_store %arg4[%c0_94, %c2_95, %c0_96, %c0_97], %99 {strides = array<i32>} : memref<1x3x256x8xf32, #tpu.memory_space<vmem>>, vector<1x1x256x8xf32>,
    %c0_98 = arith.constant 0 : index
    %c2_99 = arith.constant 2 : index
    %c0_100 = arith.constant 0 : index
    %c0_101 = arith.constant 0 : index
    %100 = vector.load %arg3[%c0_98, %c2_99, %c0_100, %c0_101] : memref<1x3x8x256xf32, #tpu.memory_space<vmem>>, vector<1x1x8x256xf32>
    %101 = vector.shape_cast %100 : vector<1x1x8x256xf32> to vector<8x256xf32>
    %102 = tpu.transpose %101, [1, 0] : vector<8x256xf32> -> vector<256x8xf32>
    %c0_102 = arith.constant 0 : index
    %c2_103 = arith.constant 2 : index
    %c0_104 = arith.constant 0 : index
    %c0_105 = arith.constant 0 : index
    %103 = vector.load %arg5[%c0_102, %c2_103, %c0_104, %c0_105] : memref<1x3x256x8xf32, #tpu.memory_space<vmem>>, vector<1x1x256x8xf32>
    %104 = vector.shape_cast %103 : vector<1x1x256x8xf32> to vector<256x8xf32>
    %105 = vector.shape_cast %102 : vector<256x8xf32> to vector<1x1x256x8xf32>
    tpu.vector_store %arg5[%c0_102, %c2_103, %c0_104, %c0_105], %105 {strides = array<i32>} : memref<1x3x256x8xf32, #tpu.memory_space<vmem>>, vector<1x1x256x8xf32>,
    return
  }
  func.func @transform_0(%arg0: i32, %arg1: i32) -> (i32, i32) {
    %c0_i32 = arith.constant 0 : i32
    %c0_i32_0 = arith.constant 0 : i32
    return %c0_i32, %arg1 : i32, i32
  }
  func.func @transform_1(%arg0: i32, %arg1: i32) -> (i32, i32, i32, i32) {
    %c0_i32 = arith.constant 0 : i32
    %c0_i32_0 = arith.constant 0 : i32
    %c0_i32_1 = arith.constant 0 : i32
    return %arg0, %c0_i32, %c0_i32_0, %arg1 : i32, i32, i32, i32
  }
  func.func @transform_2(%arg0: i32, %arg1: i32) -> (i32, i32, i32, i32) {
    %c0_i32 = arith.constant 0 : i32
    %c0_i32_0 = arith.constant 0 : i32
    %c0_i32_1 = arith.constant 0 : i32
    return %arg0, %c0_i32, %arg1, %c0_i32_0 : i32, i32, i32, i32
  }
  func.func @transform_3(%arg0: i32, %arg1: i32) -> (i32, i32, i32, i32) {
    %c0_i32 = arith.constant 0 : i32
    %c0_i32_0 = arith.constant 0 : i32
    %c0_i32_1 = arith.constant 0 : i32
    return %arg0, %c0_i32, %arg1, %c0_i32_0 : i32, i32, i32, i32
  }
}

</mosaic_0001>

<llo_original>
// kernel: tpu_custom_call.1
$region0: #{tpu_custom_call.1}
  #allocation0 [shape = 'u32[]', space=smem, size = 0x4, offset = 0x4, fixed_abs, tag = 'smem constant byte address 0x4 - core index']
  #allocation1 [shape = 'u32[144,128]{1,0:T(1,128)}', space=vmem, size = 0x12000, scoped, tag = 'internal scratch']
  #allocation2 [shape = 'f32[3,8,256]{2,1,0:T(8,128)}', space=vmem, size = 0x6000, scoped, tag = 'scratch operand']
  %s0 = inlined_call_operand.hbm [shape: f32[2,256], index: 0, kind: input, shape index: {}]
  %s1 = inlined_call_operand.hbm [shape: f32[2,3,8,256], index: 1, kind: input, shape index: {}]
  %s2 = inlined_call_operand.vmem [shape: f32[2,3,256,8], index: 2, kind: output, shape index: {0}]
  %s3 = inlined_call_operand.vmem [shape: f32[2,3,256,8], index: 3, kind: output, shape index: {1}]
  %4 = xla_tuple %s2, %s3
  %s5 = sld [smem:[#allocation0]]
  $region57: #{tpu_custom_call.1} parent=0
    _
  %s7 = ssub.s32 1, %s5
  %s8 = scalar_select 0, %s7, %s5
  $region1: #{tpu_custom_call.1} parent=0
    #allocation3 [shape = 'u8[2048]{0}', space=vmem, size = 0x800, scoped, tag = 'input window, operand 0, single buffered']
    #allocation4 [shape = 's32[2]{0}', space=sflag, size = 0x8, scoped, tag = 'scoped memory for tpu_custom_call.1']
    #allocation5 [shape = 'u8[49152]{0}', space=vmem, size = 0xc000, scoped, tag = 'input window, operand 1']
    #allocation6 [shape = 's32[2]{0}', space=sflag, size = 0x8, scoped, tag = 'scoped memory for tpu_custom_call.1']
    %9 = vsyncpa [#allocation4], 0
    %10 = vsyncpa [#allocation6], 0
    %s11 = scalar_lea.sflag [#allocation6], 1
    %12 = vsyncpa %s11, 0
    loop: start=0, step=1, limit=4
    $region2: #{tpu_custom_call.1} parent=1 // loop_pre_header
      _
    $region3: #{tpu_custom_call.1} parent=1 // loop_header
      %s14 = sphi 0, %s18
      %p15 = scmp.ge.s32.totalorder %s14, 4
      %s21 = sphi 0, %s33
      %s22 = sphi 0, %s29
      %s23 = sphi 0, %s21
      %s24 = sphi 0, %s22
      %s25 = sphi 0, %s23
      %s26 = sphi 0, %s24
      %s36 = sphi 0, %s38
      %s39 = sphi 0, %s36
      %s40 = sphi 0, %s39
      %s56 = sphi 0, %s40
      %s64 = sphi 0, %s66
      %s67 = sphi 0, %s64
      %s68 = sphi 0, %s67
      %s84 = sphi 0, %s68
      %s92 = sphi 0, %s94
      %s95 = sphi 0, %s92
      %s96 = sphi 0, %s95
      %s112 = sphi 0, %s96
      %s120 = sphi 0, %s122
      %s123 = sphi 0, %s120
      %s124 = sphi 0, %s123
      %s140 = sphi 0, %s124
    $region4: #{tpu_custom_call.1} parent=1 // loop_header_branch
      %17 = sbr.rel (%p15) target = $region8
    $region5: #{tpu_custom_call.1} parent=1 // loop_body
      %s19 = ssub.s32 %s14, 1
      %s20 = ssub.s32 %s14, 2
      %s27 = sadd.s32 1, %s22
      %p28 = scmp.ge.s32.totalorder %s27, 1
      %s29 = scalar_select %p28, 0, %s27
      %s30 = sadd.s32 1, %s21
      %s31 = scalar_select %p28, %s30, %s21
      %p32 = scmp.ge.s32.totalorder %s31, 2
      %s33 = scalar_select %p32, 0, %s31
      %s34 = ssub.s32 %s22, %s29
      %p35 = scmp.eq.s32.totalorder %s34, 0
      %s37 = sadd.s32 %s36, 1
      %s38 = scalar_select %p35, %s36, %s37
      %p41 = pneg %p35
      %p42 = scmp.eq.s32.totalorder %s14, 1
      %p43 = por %p41, %p42
      %p44 = scmp.ne.s32.totalorder %s36, %s39
      %p45 = scmp.eq.s32.totalorder %s14, 0
      %p46 = por %p44, %p45
      %p47 = scmp.ne.s32.totalorder %s36, %s39
      %p48 = scmp.eq.s32.totalorder %s19, 1
      %p49 = por %p47, %p48
      %p50 = scmp.ne.s32.totalorder %s39, %s40
      %p51 = scmp.eq.s32.totalorder %s19, 0
      %p52 = por %p50, %p51
      %p53 = scmp.ne.s32.totalorder %s39, %s40
      %p54 = scmp.eq.s32.totalorder %s20, 1
      %p55 = por %p53, %p54
      %p57 = scmp.ne.s32.totalorder %s40, %s56
      %p58 = scmp.eq.s32.totalorder %s20, 0
      %p59 = por %p57, %p58
      %s60 = ssub.s32 %s21, %s33
      %s61 = ssub.s32 %s22, %s29
      %s62 = sor.u32 %s60, %s61
      %p63 = scmp.eq.s32.totalorder %s62, 0
      %s65 = sadd.s32 %s64, 1
      %s66 = scalar_select %p63, %s64, %s65
      %p69 = pneg %p63
      %p70 = scmp.eq.s32.totalorder %s14, 1
      %p71 = por %p69, %p70
      %p72 = scmp.ne.s32.totalorder %s64, %s67
      %p73 = scmp.eq.s32.totalorder %s14, 0
      %p74 = por %p72, %p73
      %p75 = scmp.ne.s32.totalorder %s64, %s67
      %p76 = scmp.eq.s32.totalorder %s19, 1
      %p77 = por %p75, %p76
      %p78 = scmp.ne.s32.totalorder %s67, %s68
      %p79 = scmp.eq.s32.totalorder %s19, 0
      %p80 = por %p78, %p79
      %p81 = scmp.ne.s32.totalorder %s67, %s68
      %p82 = scmp.eq.s32.totalorder %s20, 1
      %p83 = por %p81, %p82
      %p85 = scmp.ne.s32.totalorder %s68, %s84
      %p86 = scmp.eq.s32.totalorder %s20, 0
      %p87 = por %p85, %p86
      %s88 = ssub.s32 %s21, %s33
      %s89 = ssub.s32 %s22, %s29
      %s90 = sor.u32 %s88, %s89
      %p91 = scmp.eq.s32.totalorder %s90, 0
      %s93 = sadd.s32 %s92, 1
      %s94 = scalar_select %p91, %s92, %s93
      %p97 = pneg %p91
      %p98 = scmp.eq.s32.totalorder %s14, 1
      %p99 = por %p97, %p98
      %p100 = scmp.ne.s32.totalorder %s92, %s95
      %p101 = scmp.eq.s32.totalorder %s14, 0
      %p102 = por %p100, %p101
      %p103 = scmp.ne.s32.totalorder %s92, %s95
      %p104 = scmp.eq.s32.totalorder %s19, 1
      %p105 = por %p103, %p104
      %p106 = scmp.ne.s32.totalorder %s95, %s96
      %p107 = scmp.eq.s32.totalorder %s19, 0
      %p108 = por %p106, %p107
      %p109 = scmp.ne.s32.totalorder %s95, %s96
      %p110 = scmp.eq.s32.totalorder %s20, 1
      %p111 = por %p109, %p110
      %p113 = scmp.ne.s32.totalorder %s96, %s112
      %p114 = scmp.eq.s32.totalorder %s20, 0
      %p115 = por %p113, %p114
      %s116 = ssub.s32 %s21, %s33
      %s117 = ssub.s32 %s22, %s29
      %s118 = sor.u32 %s116, %s117
      %p119 = scmp.eq.s32.totalorder %s118, 0
      %s121 = sadd.s32 %s120, 1
      %s122 = scalar_select %p119, %s120, %s121
      %p125 = pneg %p119
      %p126 = scmp.eq.s32.totalorder %s14, 1
      %p127 = por %p125, %p126
      %p128 = scmp.ne.s32.totalorder %s120, %s123
      %p129 = scmp.eq.s32.totalorder %s14, 0
      %p130 = por %p128, %p129
      %p131 = scmp.ne.s32.totalorder %s120, %s123
      %p132 = scmp.eq.s32.totalorder %s19, 1
      %p133 = por %p131, %p132
      %p134 = scmp.ne.s32.totalorder %s123, %s124
      %p135 = scmp.eq.s32.totalorder %s19, 0
      %p136 = por %p134, %p135
      %p137 = scmp.ne.s32.totalorder %s123, %s124
      %p138 = scmp.eq.s32.totalorder %s20, 1
      %p139 = por %p137, %p138
      %p141 = scmp.ne.s32.totalorder %s124, %s140
      %p142 = scmp.eq.s32.totalorder %s20, 0
      %p143 = por %p141, %p142
      %p144 = scmp.le.s32.totalorder 1, %s14
      %p145 = scmp.lt.s32.totalorder %s14, 3
      %p146 = pnand %p144, %p145
      %p147 = pneg %p146
      // Predicated region
      $region9: #{tpu_custom_call.1} parent=5 // pred_check
        _
      $region10: #{tpu_custom_call.1} parent=5 // pred_check_branch
        %149 = sbr.rel (%p146) target = $region12
      $region11: #{tpu_custom_call.1} parent=5 // pred_region
        %s150 = ssub.s32 %s14, 1
        // Predicated region
        $region13: #{tpu_custom_call.1} parent=11 // pred_check
          %p151 = pneg %p52
        $region14: #{tpu_custom_call.1} parent=11 // pred_check_branch
          %153 = sbr.rel (%p151) target = $region16
        $region15: #{tpu_custom_call.1} parent=11 // pred_region
          %s154 = smul.u32 2, %s24
          %s156 = ssub.s32 64, 64
          %157 = vsyncadd [#allocation4], %s156
          %s158 = smul.addr %s154, 32
          %s159 = scalar_lea.hbm %s0, %s158
          %s161 = sshll.u32 [#allocation3], 4
          %s162 = int_to_ptr.vmem [resolvable:$true] %s161
          %164 = dma.hbm_to_vmem [thread:$0]  %s159, 64, %s162, [#allocation4]
        $region16: #{tpu_custom_call.1} parent=11 // pred_fallthru
          _
      $region12: #{tpu_custom_call.1} parent=5 // pred_fallthru
        _
      %p165 = scmp.lt.s32.totalorder %s14, 2
      // Predicated region
      $region17: #{tpu_custom_call.1} parent=5 // pred_check
        %p166 = pneg %p165
      $region18: #{tpu_custom_call.1} parent=5 // pred_check_branch
        %168 = sbr.rel (%p166) target = $region20
      $region19: #{tpu_custom_call.1} parent=5 // pred_region
        // Predicated region
        $region21: #{tpu_custom_call.1} parent=19 // pred_check
          %p169 = pneg %p74
        $region22: #{tpu_custom_call.1} parent=19 // pred_check_branch
          %171 = sbr.rel (%p169) target = $region24
        $region23: #{tpu_custom_call.1} parent=19 // pred_region
          %s172 = sand.u32 %s64, 1
          %s173 = scalar_lea.sflag [#allocation6], %s172
          %s174 = sand.u32 %s64, 1
          %s175 = smul.addr %s174, 48
          %s176 = scalar_lea.vmem [#allocation5], %s175
          %s177 = smul.u32 2, %s22
          %s179 = ssub.s32 768, 768
          %180 = vsyncadd %s173, %s179
          %s181 = smul.addr %s21, 6
          %s182 = sadd.s32 %s177, %s181
          %s183 = smul.addr %s182, 128
          %s184 = scalar_lea.hbm %s1, %s183
          %s185 = sshll.u32 %s176, 4
          %s186 = int_to_ptr.vmem [resolvable:$true] %s185
          %191 = dma.hbm_to_vmem [thread:$0]  %s184, 768, %s186, %s173, 256, 256, 16
        $region24: #{tpu_custom_call.1} parent=19 // pred_fallthru
          _
      $region20: #{tpu_custom_call.1} parent=5 // pred_fallthru
        _
      %p192 = scmp.le.s32.totalorder 1, %s14
      %p193 = scmp.lt.s32.totalorder %s14, 3
      %p194 = pnand %p192, %p193
      %p195 = pneg %p194
      // Predicated region
      $region25: #{tpu_custom_call.1} parent=5 // pred_check
        _
      $region26: #{tpu_custom_call.1} parent=5 // pred_check_branch
        %197 = sbr.rel (%p194) target = $region28
      $region27: #{tpu_custom_call.1} parent=5 // pred_region
        %s198 = ssub.s32 %s14, 1
        // Predicated region
        $region29: #{tpu_custom_call.1} parent=27 // pred_check
          %p199 = pneg %p52
        $region30: #{tpu_custom_call.1} parent=27 // pred_check_branch
          %201 = sbr.rel (%p199) target = $region32
        $region31: #{tpu_custom_call.1} parent=27 // pred_region
          %202 = dma.done [#allocation4], 64
        $region32: #{tpu_custom_call.1} parent=27 // pred_fallthru
          _
        %s203 = sand.u32 %s67, 1
        %s204 = scalar_lea.sflag [#allocation6], %s203
        %s205 = sand.u32 %s67, 1
        %s206 = smul.addr %s205, 48
        %s207 = scalar_lea.vmem [#allocation5], %s206
        // Predicated region
        $region33: #{tpu_custom_call.1} parent=27 // pred_check
          %p208 = pneg %p80
        $region34: #{tpu_custom_call.1} parent=27 // pred_check_branch
          %210 = sbr.rel (%p208) target = $region36
        $region35: #{tpu_custom_call.1} parent=27 // pred_region
          %211 = dma.done %s204, 768
        $region36: #{tpu_custom_call.1} parent=27 // pred_fallthru
          _
        %p212 = pneg %p52
        %p213 = pneg %p49
        %s214 = sand.u32 %s67, 1
        %s215 = scalar_lea.sflag [#allocation6], %s214
        %s216 = sand.u32 %s67, 1
        %s217 = smul.addr %s216, 48
        %s218 = scalar_lea.vmem [#allocation5], %s217
        %p219 = pneg %p80
        %p220 = pneg %p77
        %p221 = pneg %p108
        %p222 = pneg %p105
        %s223 = smul.u32 32, %s24
        %p224 = scmp.lt.s32.totalorder %s23, 1
        %s225 = scalar_select %p224, %s23, 1
        %p226 = scmp.lt.s32.totalorder %s223, 31
        %s227 = scalar_select %p226, %s223, 31
        %s228 = smul.addr %s225, 96
        %s229 = sadd.s32 %s227, %s228
        %s230 = smul.addr %s229, 8
        %s231 = scalar_lea.vmem %s2, %s230
        %p232 = pneg %p136
        %p233 = pneg %p133
        %s234 = smul.u32 32, %s24
        %p235 = scmp.lt.s32.totalorder %s23, 1
        %s236 = scalar_select %p235, %s23, 1
        %p237 = scmp.lt.s32.totalorder %s234, 31
        %s238 = scalar_select %p237, %s234, 31
        %s239 = smul.addr %s236, 96
        %s240 = sadd.s32 %s238, %s239
        %s241 = smul.addr %s240, 8
        %s242 = scalar_lea.vmem %s3, %s241
        %s243 = smul.u32 2, %s24
        %s244 = smul.u32 2, %s24
        %s245 = smul.u32 32, %s24
        %p246 = scmp.lt.s32.totalorder %s23, 1
        %s247 = scalar_select %p246, %s23, 1
        %p248 = scmp.lt.s32.totalorder %s245, 31
        %s249 = scalar_select %p248, %s245, 31
        %s250 = smul.addr %s247, 96
        %s251 = sadd.s32 %s249, %s250
        %s252 = smul.addr %s251, 8
        %s253 = scalar_lea.vmem %s2, %s252
        %s254 = smul.u32 32, %s24
        %s255 = smul.u32 32, %s24
        %p256 = scmp.lt.s32.totalorder %s23, 1
        %s257 = scalar_select %p256, %s23, 1
        %p258 = scmp.lt.s32.totalorder %s255, 31
        %s259 = scalar_select %p258, %s255, 31
        %s260 = smul.addr %s257, 96
        %s261 = sadd.s32 %s259, %s260
        %s262 = smul.addr %s261, 8
        %s263 = scalar_lea.vmem %s3, %s262
        %s264 = smul.u32 32, %s24
        %v265 = vld [vmem:[#allocation3] sm:$0xf]
        %v266 = vld [vmem:[%s207] sm:$0x3]
        %v267 = vld [vmem:[%s207 + $0x8] sm:$0x3]
        %v268 = vld [vmem:[%s207 + $0x10] sm:$0x3]
        %v269 = vld [vmem:[%s207 + $0x18] sm:$0x3]
        %v270 = vld [vmem:[%s207 + $0x20] sm:$0x3]
        %v271 = vld [vmem:[%s207 + $0x28] sm:$0x3]
        %v272 = vxor.u32 %v266, 2147483648
        %v273 = vxor.u32 %v267, 2147483648
        %v274 = vxor.u32 %v268, 2147483648
        %v275 = vxor.u32 %v269, 2147483648
        %v276 = vxor.u32 %v270, 2147483648
        %v277 = vxor.u32 %v271, 2147483648
        %v278 = vmul.f32 %v272, 1.442695
        %v279 = vpow.pop %v278
        %v280 = vmul.f32 %v273, 1.442695
        %v281 = vpow.pop %v280
        %v282 = vmul.f32 %v274, 1.442695
        %v283 = vpow.pop %v282
        %v284 = vmul.f32 %v275, 1.442695
        %v285 = vpow.pop %v284
        %v286 = vmul.f32 %v276, 1.442695
        %v287 = vpow.pop %v286
        %v288 = vmul.f32 %v277, 1.442695
        %v289 = vpow.pop %v288
        %v290 = vadd.f32 %v279, 1.0
        %v291 = vadd.f32 %v281, 1.0
        %v292 = vadd.f32 %v283, 1.0
        %v293 = vadd.f32 %v285, 1.0
        %v294 = vadd.f32 %v287, 1.0
        %v295 = vadd.f32 %v289, 1.0
        %v296 = vrcp.pop %v290
        %v297 = vmul.f32 1.0, %v296
        %v298 = vrcp.pop %v291
        %v299 = vmul.f32 1.0, %v298
        %v300 = vrcp.pop %v292
        %v301 = vmul.f32 1.0, %v300
        %v302 = vrcp.pop %v293
        %v303 = vmul.f32 1.0, %v302
        %v304 = vrcp.pop %v294
        %v305 = vmul.f32 1.0, %v304
        %v306 = vrcp.pop %v295
        %v307 = vmul.f32 1.0, %v306
        %v310 = vunpack.c.l.s4 1983009808
        %v311 = vunpack.c.0.s8 %v310
        %v312 = vlaneseq
        %v313 = vshrl.u32 %v312, 7
        %v314 = vsub.s32 %v311, %v313
        %v315 = vrot.slane %v265, %v314
        %v316 = vcombine.high %v315, %v315
        %v319 = vadd.f32 %v297, %v315
        %v320 = vadd.f32 %v299, %v316
        %v321 = vadd.f32 %v301, %v315
        %v322 = vadd.f32 %v303, %v316
        %v323 = vadd.f32 %v305, %v315
        %v324 = vadd.f32 %v307, %v316
        %v325 = vmul.f32 %v319, 16.0
        %v326 = vmul.f32 %v320, 16.0
        %v327 = vmul.f32 %v321, 16.0
        %v328 = vmul.f32 %v322, 16.0
        %v329 = vmul.f32 %v323, 16.0
        %v330 = vmul.f32 %v324, 16.0
        %331 = vst [vmem:[#allocation2] sm:$0x3] %v325
        %332 = vst [vmem:[#allocation2 + $0x8] sm:$0x3] %v326
        %333 = vst [vmem:[#allocation2 + $0x10] sm:$0x3] %v327
        %334 = vst [vmem:[#allocation2 + $0x18] sm:$0x3] %v328
        %335 = vst [vmem:[#allocation2 + $0x20] sm:$0x3] %v329
        %336 = vst [vmem:[#allocation2 + $0x28] sm:$0x3] %v330
        %s337 = scalar_lea.vmem %s207, 2 [#allocation5]
        %v338 = vld [vmem:[%s337] ss:$8 sm:$0x3]
        %v339 = vmul.f32 %v338, 1.442695
        %v340 = vpow.pop %v339
        %v341 = vmul.f32 %v340, 10.0
        %v342 = vlaneseq
        %vm343 = vcmp.ge.s32.totalorder %v342, 0
        %vm344 = vcmp.lt.s32.totalorder %v342, 256
        %vm345 = vmand %vm343, %vm344
        %s346 = scalar_lea.vmem [#allocation2], 2
        %347 = vst.msk [vmem:[%s346] ss:$8 sm:$0x3] %vm345, %v341
        %348 = vst.msk [vmem:[%s346] ss:$8 sm:$0x0] %vm345, %v341
        %s349 = scalar_lea.vmem %s207, 3 [#allocation5]
        %v350 = vld [vmem:[%s349] ss:$8 sm:$0x3]
        %v351 = vmul.f32 %v350, 1.442695
        %v352 = vpow.pop %v351
        %v353 = vmul.f32 %v352, 13.0
        %s354 = scalar_lea.vmem [#allocation2], 3
        %355 = vst.msk [vmem:[%s354] ss:$8 sm:$0x3] %vm345, %v353
        %356 = vst.msk [vmem:[%s354] ss:$8 sm:$0x0] %vm345, %v353
        %s357 = scalar_lea.vmem %s207, 16 [#allocation5]
        %s358 = scalar_lea.vmem %s357, 2 [#allocation5]
        %v359 = vld [vmem:[%s358] ss:$8 sm:$0x3]
        %v360 = vmul.f32 %v359, 1.442695
        %v361 = vpow.pop %v360
        %v362 = vmul.f32 %v361, 16.0
        %s363 = scalar_lea.vmem [#allocation2], 16
        %s364 = scalar_lea.vmem %s363, 2 [#allocation2]
        %365 = vst.msk [vmem:[%s364] ss:$8 sm:$0x3] %vm345, %v362
        %366 = vst.msk [vmem:[%s364] ss:$8 sm:$0x0] %vm345, %v362
        %s367 = scalar_lea.vmem %s357, 3 [#allocation5]
        %v368 = vld [vmem:[%s367] ss:$8 sm:$0x3]
        %v369 = vmul.f32 %v368, 1.442695
        %v370 = vpow.pop %v369
        %v371 = vmul.f32 %v370, 30.0
        %s372 = scalar_lea.vmem %s363, 3 [#allocation2]
        %373 = vst.msk [vmem:[%s372] ss:$8 sm:$0x3] %vm345, %v371
        %374 = vst.msk [vmem:[%s372] ss:$8 sm:$0x0] %vm345, %v371
        %s375 = scalar_lea.vmem %s207, 32 [#allocation5]
        %s376 = scalar_lea.vmem %s375, 2 [#allocation5]
        %v377 = vld [vmem:[%s376] ss:$8 sm:$0x3]
        %v378 = vmul.f32 %v377, 1.442695
        %v379 = vpow.pop %v378
        %v380 = vmul.f32 %v379, 33.0
        %s381 = scalar_lea.vmem [#allocation2], 32
        %s382 = scalar_lea.vmem %s381, 2 [#allocation2]
        %383 = vst.msk [vmem:[%s382] ss:$8 sm:$0x3] %vm345, %v380
        %384 = vst.msk [vmem:[%s382] ss:$8 sm:$0x0] %vm345, %v380
        %s385 = scalar_lea.vmem %s375, 3 [#allocation5]
        %v386 = vld [vmem:[%s385] ss:$8 sm:$0x3]
        %v387 = vmul.f32 %v386, 1.442695
        %v388 = vpow.pop %v387
        %v389 = vmul.f32 %v388, 23.0
        %s390 = scalar_lea.vmem %s381, 3 [#allocation2]
        %391 = vst.msk [vmem:[%s390] ss:$8 sm:$0x3] %vm345, %v389
        %392 = vst.msk [vmem:[%s390] ss:$8 sm:$0x0] %vm345, %v389
        %v393 = vld [vmem:[%s207] sm:$0xf0]
        %v394 = vld [vmem:[%s207 + $0x8] sm:$0xf0]
        %v395 = vld [vmem:[%s207 + $0x10] sm:$0xf0]
        %v396 = vld [vmem:[%s207 + $0x18] sm:$0xf0]
        %v397 = vld [vmem:[%s207 + $0x20] sm:$0xf0]
        %v398 = vld [vmem:[%s207 + $0x28] sm:$0xf0]
        %v399 = vxor.u32 %v393, 2147483648
        %v400 = vxor.u32 %v394, 2147483648
        %v401 = vxor.u32 %v395, 2147483648
        %v402 = vxor.u32 %v396, 2147483648
        %v403 = vxor.u32 %v397, 2147483648
        %v404 = vxor.u32 %v398, 2147483648
        %v405 = vmul.f32 %v399, 1.442695
        %v406 = vpow.pop %v405
        %v407 = vmul.f32 %v400, 1.442695
        %v408 = vpow.pop %v407
        %v409 = vmul.f32 %v401, 1.442695
        %v410 = vpow.pop %v409
        %v411 = vmul.f32 %v402, 1.442695
        %v412 = vpow.pop %v411
        %v413 = vmul.f32 %v403, 1.442695
        %v414 = vpow.pop %v413
        %v415 = vmul.f32 %v404, 1.442695
        %v416 = vpow.pop %v415
        %v417 = vadd.f32 %v406, 1.0
        %v418 = vadd.f32 %v408, 1.0
        %v419 = vadd.f32 %v410, 1.0
        %v420 = vadd.f32 %v412, 1.0
        %v421 = vadd.f32 %v414, 1.0
        %v422 = vadd.f32 %v416, 1.0
        %v423 = vrcp.pop %v417
        %v424 = vmul.f32 1.0, %v423
        %v425 = vrcp.pop %v418
        %v426 = vmul.f32 1.0, %v425
        %v427 = vrcp.pop %v419
        %v428 = vmul.f32 1.0, %v427
        %v429 = vrcp.pop %v420
        %v430 = vmul.f32 1.0, %v429
        %v431 = vrcp.pop %v421
        %v432 = vmul.f32 1.0, %v431
        %v433 = vrcp.pop %v422
        %v434 = vmul.f32 1.0, %v433
        %435 = vst [vmem:[#allocation2] sm:$0xf0] %v424
        %436 = vst [vmem:[#allocation2 + $0x8] sm:$0xf0] %v426
        %437 = vst [vmem:[#allocation2 + $0x10] sm:$0xf0] %v428
        %438 = vst [vmem:[#allocation2 + $0x18] sm:$0xf0] %v430
        %439 = vst [vmem:[#allocation2 + $0x20] sm:$0xf0] %v432
        %440 = vst [vmem:[#allocation2 + $0x28] sm:$0xf0] %v434
        %v441 = vld [vmem:[#allocation2] sm:$0xff]
        %v442 = vld [vmem:[#allocation2 + $0x8] sm:$0xff]
        %443 = vxpose.xlu0.b32.start [1/16] %v441, 128
        %444 = vxpose.xlu0.b32.cont [2/16] 0.0, 128
        %445 = vxpose.xlu0.b32.cont [3/16] 0.0, 128
        %446 = vxpose.xlu0.b32.cont [4/16] 0.0, 128
        %447 = vxpose.xlu0.b32.cont [5/16] 0.0, 128
        %448 = vxpose.xlu0.b32.cont [6/16] 0.0, 128
        %449 = vxpose.xlu0.b32.cont [7/16] 0.0, 128
        %450 = vxpose.xlu0.b32.cont [8/16] 0.0, 128
        %451 = vxpose.xlu0.b32.cont [9/16] 0.0, 128
        %452 = vxpose.xlu0.b32.cont [10/16] 0.0, 128
        %453 = vxpose.xlu0.b32.cont [11/16] 0.0, 128
        %454 = vxpose.xlu0.b32.cont [12/16] 0.0, 128
        %455 = vxpose.xlu0.b32.cont [13/16] 0.0, 128
        %456 = vxpose.xlu0.b32.cont [14/16] 0.0, 128
        %457 = vxpose.xlu0.b32.cont [15/16] 0.0, 128
        %458 = vxpose.xlu0.b32.end [16/16] 0.0, 128
        %v459 = vpop.trf.xlu0
        %v460 = vpop.trf.xlu0
        %v461 = vpop.trf.xlu0
        %v462 = vpop.trf.xlu0
        %v463 = vpop.trf.xlu0
        %v464 = vpop.trf.xlu0
        %v465 = vpop.trf.xlu0
        %v466 = vpop.trf.xlu0
        %v467 = vpop.trf.xlu0
        %v468 = vpop.trf.xlu0
        %v469 = vpop.trf.xlu0
        %v470 = vpop.trf.xlu0
        %v471 = vpop.trf.xlu0
        %v472 = vpop.trf.xlu0
        %v473 = vpop.trf.xlu0
        %v474 = vpop.trf.xlu0
        %475 = vxpose.xlu0.b32.start [1/16] %v442, 128
        %476 = vxpose.xlu0.b32.cont [2/16] 0.0, 128
        %477 = vxpose.xlu0.b32.cont [3/16] 0.0, 128
        %478 = vxpose.xlu0.b32.cont [4/16] 0.0, 128
        %479 = vxpose.xlu0.b32.cont [5/16] 0.0, 128
        %480 = vxpose.xlu0.b32.cont [6/16] 0.0, 128
        %481 = vxpose.xlu0.b32.cont [7/16] 0.0, 128
        %482 = vxpose.xlu0.b32.cont [8/16] 0.0, 128
        %483 = vxpose.xlu0.b32.cont [9/16] 0.0, 128
        %484 = vxpose.xlu0.b32.cont [10/16] 0.0, 128
        %485 = vxpose.xlu0.b32.cont [11/16] 0.0, 128
        %486 = vxpose.xlu0.b32.cont [12/16] 0.0, 128
        %487 = vxpose.xlu0.b32.cont [13/16] 0.0, 128
        %488 = vxpose.xlu0.b32.cont [14/16] 0.0, 128
        %489 = vxpose.xlu0.b32.cont [15/16] 0.0, 128
        %490 = vxpose.xlu0.b32.end [16/16] 0.0, 128
        %v491 = vpop.trf.xlu0
        %v492 = vpop.trf.xlu0
        %v493 = vpop.trf.xlu0
        %v494 = vpop.trf.xlu0
        %v495 = vpop.trf.xlu0
        %v496 = vpop.trf.xlu0
        %v497 = vpop.trf.xlu0
        %v498 = vpop.trf.xlu0
        %v499 = vpop.trf.xlu0
        %v500 = vpop.trf.xlu0
        %v501 = vpop.trf.xlu0
        %v502 = vpop.trf.xlu0
        %v503 = vpop.trf.xlu0
        %v504 = vpop.trf.xlu0
        %v505 = vpop.trf.xlu0
        %v506 = vpop.trf.xlu0
        %vm507 = vcmask 64512
        %508 = vst.msk [vmem:[%s253] sm:$0xff] %vm507, %v459
        %509 = vst.msk [vmem:[%s253 + $0x8] sm:$0xff] %vm507, %v460
        %510 = vst.msk [vmem:[%s253 + $0x10] sm:$0xff] %vm507, %v461
        %511 = vst.msk [vmem:[%s253 + $0x18] sm:$0xff] %vm507, %v462
        %512 = vst.msk [vmem:[%s253 + $0x20] sm:$0xff] %vm507, %v463
        %513 = vst.msk [vmem:[%s253 + $0x28] sm:$0xff] %vm507, %v464
        %514 = vst.msk [vmem:[%s253 + $0x30] sm:$0xff] %vm507, %v465
        %515 = vst.msk [vmem:[%s253 + $0x38] sm:$0xff] %vm507, %v466
        %516 = vst.msk [vmem:[%s253 + $0x40] sm:$0xff] %vm507, %v467
        %517 = vst.msk [vmem:[%s253 + $0x48] sm:$0xff] %vm507, %v468
        %518 = vst.msk [vmem:[%s253 + $0x50] sm:$0xff] %vm507, %v469
        %519 = vst.msk [vmem:[%s253 + $0x58] sm:$0xff] %vm507, %v470
        %520 = vst.msk [vmem:[%s253 + $0x60] sm:$0xff] %vm507, %v471
        %521 = vst.msk [vmem:[%s253 + $0x68] sm:$0xff] %vm507, %v472
        %522 = vst.msk [vmem:[%s253 + $0x70] sm:$0xff] %vm507, %v473
        %523 = vst.msk [vmem:[%s253 + $0x78] sm:$0xff] %vm507, %v474
        %524 = vst.msk [vmem:[%s253 + $0x80] sm:$0xff] %vm507, %v491
        %525 = vst.msk [vmem:[%s253 + $0x88] sm:$0xff] %vm507, %v492
        %526 = vst.msk [vmem:[%s253 + $0x90] sm:$0xff] %vm507, %v493
        %527 = vst.msk [vmem:[%s253 + $0x98] sm:$0xff] %vm507, %v494
        %528 = vst.msk [vmem:[%s253 + $0xa0] sm:$0xff] %vm507, %v495
        %529 = vst.msk [vmem:[%s253 + $0xa8] sm:$0xff] %vm507, %v496
        %530 = vst.msk [vmem:[%s253 + $0xb0] sm:$0xff] %vm507, %v497
        %531 = vst.msk [vmem:[%s253 + $0xb8] sm:$0xff] %vm507, %v498
        %532 = vst.msk [vmem:[%s253 + $0xc0] sm:$0xff] %vm507, %v499
        %533 = vst.msk [vmem:[%s253 + $0xc8] sm:$0xff] %vm507, %v500
        %534 = vst.msk [vmem:[%s253 + $0xd0] sm:$0xff] %vm507, %v501
        %535 = vst.msk [vmem:[%s253 + $0xd8] sm:$0xff] %vm507, %v502
        %536 = vst.msk [vmem:[%s253 + $0xe0] sm:$0xff] %vm507, %v503
        %537 = vst.msk [vmem:[%s253 + $0xe8] sm:$0xff] %vm507, %v504
        %538 = vst.msk [vmem:[%s253 + $0xf0] sm:$0xff] %vm507, %v505
        %539 = vst.msk [vmem:[%s253 + $0xf8] sm:$0xff] %vm507, %v506
        %v540 = vld [vmem:[%s207] sm:$0xff]
        %v541 = vld [vmem:[%s207 + $0x8] sm:$0xff]
        %542 = vxpose.xlu0.b32.start [1/16] %v540, 128
        %543 = vxpose.xlu0.b32.cont [2/16] 0.0, 128
        %544 = vxpose.xlu0.b32.cont [3/16] 0.0, 128
        %545 = vxpose.xlu0.b32.cont [4/16] 0.0, 128
        %546 = vxpose.xlu0.b32.cont [5/16] 0.0, 128
        %547 = vxpose.xlu0.b32.cont [6/16] 0.0, 128
        %548 = vxpose.xlu0.b32.cont [7/16] 0.0, 128
        %549 = vxpose.xlu0.b32.cont [8/16] 0.0, 128
        %550 = vxpose.xlu0.b32.cont [9/16] 0.0, 128
        %551 = vxpose.xlu0.b32.cont [10/16] 0.0, 128
        %552 = vxpose.xlu0.b32.cont [11/16] 0.0, 128
        %553 = vxpose.xlu0.b32.cont [12/16] 0.0, 128
        %554 = vxpose.xlu0.b32.cont [13/16] 0.0, 128
        %555 = vxpose.xlu0.b32.cont [14/16] 0.0, 128
        %556 = vxpose.xlu0.b32.cont [15/16] 0.0, 128
        %557 = vxpose.xlu0.b32.end [16/16] 0.0, 128
        %v558 = vpop.trf.xlu0
        %v559 = vpop.trf.xlu0
        %v560 = vpop.trf.xlu0
        %v561 = vpop.trf.xlu0
        %v562 = vpop.trf.xlu0
        %v563 = vpop.trf.xlu0
        %v564 = vpop.trf.xlu0
        %v565 = vpop.trf.xlu0
        %v566 = vpop.trf.xlu0
        %v567 = vpop.trf.xlu0
        %v568 = vpop.trf.xlu0
        %v569 = vpop.trf.xlu0
        %v570 = vpop.trf.xlu0
        %v571 = vpop.trf.xlu0
        %v572 = vpop.trf.xlu0
        %v573 = vpop.trf.xlu0
        %574 = vxpose.xlu0.b32.start [1/16] %v541, 128
        %575 = vxpose.xlu0.b32.cont [2/16] 0.0, 128
        %576 = vxpose.xlu0.b32.cont [3/16] 0.0, 128
        %577 = vxpose.xlu0.b32.cont [4/16] 0.0, 128
        %578 = vxpose.xlu0.b32.cont [5/16] 0.0, 128
        %579 = vxpose.xlu0.b32.cont [6/16] 0.0, 128
        %580 = vxpose.xlu0.b32.cont [7/16] 0.0, 128
        %581 = vxpose.xlu0.b32.cont [8/16] 0.0, 128
        %582 = vxpose.xlu0.b32.cont [9/16] 0.0, 128
        %583 = vxpose.xlu0.b32.cont [10/16] 0.0, 128
        %584 = vxpose.xlu0.b32.cont [11/16] 0.0, 128
        %585 = vxpose.xlu0.b32.cont [12/16] 0.0, 128
        %586 = vxpose.xlu0.b32.cont [13/16] 0.0, 128
        %587 = vxpose.xlu0.b32.cont [14/16] 0.0, 128
        %588 = vxpose.xlu0.b32.cont [15/16] 0.0, 128
        %589 = vxpose.xlu0.b32.end [16/16] 0.0, 128
        %v590 = vpop.trf.xlu0
        %v591 = vpop.trf.xlu0
        %v592 = vpop.trf.xlu0
        %v593 = vpop.trf.xlu0
        %v594 = vpop.trf.xlu0
        %v595 = vpop.trf.xlu0
        %v596 = vpop.trf.xlu0
        %v597 = vpop.trf.xlu0
        %v598 = vpop.trf.xlu0
        %v599 = vpop.trf.xlu0
        %v600 = vpop.trf.xlu0
        %v601 = vpop.trf.xlu0
        %v602 = vpop.trf.xlu0
        %v603 = vpop.trf.xlu0
        %v604 = vpop.trf.xlu0
        %v605 = vpop.trf.xlu0
        %606 = vst.msk [vmem:[%s263] sm:$0xff] %vm507, %v558
        %607 = vst.msk [vmem:[%s263 + $0x8] sm:$0xff] %vm507, %v559
        %608 = vst.msk [vmem:[%s263 + $0x10] sm:$0xff] %vm507, %v560
        %609 = vst.msk [vmem:[%s263 + $0x18] sm:$0xff] %vm507, %v561
        %610 = vst.msk [vmem:[%s263 + $0x20] sm:$0xff] %vm507, %v562
        %611 = vst.msk [vmem:[%s263 + $0x28] sm:$0xff] %vm507, %v563
        %612 = vst.msk [vmem:[%s263 + $0x30] sm:$0xff] %vm507, %v564
        %613 = vst.msk [vmem:[%s263 + $0x38] sm:$0xff] %vm507, %v565
        %614 = vst.msk [vmem:[%s263 + $0x40] sm:$0xff] %vm507, %v566
        %615 = vst.msk [vmem:[%s263 + $0x48] sm:$0xff] %vm507, %v567
        %616 = vst.msk [vmem:[%s263 + $0x50] sm:$0xff] %vm507, %v568
        %617 = vst.msk [vmem:[%s263 + $0x58] sm:$0xff] %vm507, %v569
        %618 = vst.msk [vmem:[%s263 + $0x60] sm:$0xff] %vm507, %v570
        %619 = vst.msk [vmem:[%s263 + $0x68] sm:$0xff] %vm507, %v571
        %620 = vst.msk [vmem:[%s263 + $0x70] sm:$0xff] %vm507, %v572
        %621 = vst.msk [vmem:[%s263 + $0x78] sm:$0xff] %vm507, %v573
        %622 = vst.msk [vmem:[%s263 + $0x80] sm:$0xff] %vm507, %v590
        %623 = vst.msk [vmem:[%s263 + $0x88] sm:$0xff] %vm507, %v591
        %624 = vst.msk [vmem:[%s263 + $0x90] sm:$0xff] %vm507, %v592
        %625 = vst.msk [vmem:[%s263 + $0x98] sm:$0xff] %vm507, %v593
        %626 = vst.msk [vmem:[%s263 + $0xa0] sm:$0xff] %vm507, %v594
        %627 = vst.msk [vmem:[%s263 + $0xa8] sm:$0xff] %vm507, %v595
        %628 = vst.msk [vmem:[%s263 + $0xb0] sm:$0xff] %vm507, %v596
        %629 = vst.msk [vmem:[%s263 + $0xb8] sm:$0xff] %vm507, %v597
        %630 = vst.msk [vmem:[%s263 + $0xc0] sm:$0xff] %vm507, %v598
        %631 = vst.msk [vmem:[%s263 + $0xc8] sm:$0xff] %vm507, %v599
        %632 = vst.msk [vmem:[%s263 + $0xd0] sm:$0xff] %vm507, %v600
        %633 = vst.msk [vmem:[%s263 + $0xd8] sm:$0xff] %vm507, %v601
        %634 = vst.msk [vmem:[%s263 + $0xe0] sm:$0xff] %vm507, %v602
        %635 = vst.msk [vmem:[%s263 + $0xe8] sm:$0xff] %vm507, %v603
        %636 = vst.msk [vmem:[%s263 + $0xf0] sm:$0xff] %vm507, %v604
        %637 = vst.msk [vmem:[%s263 + $0xf8] sm:$0xff] %vm507, %v605
        %v638 = vld [vmem:[%s363] sm:$0xff]
        %v639 = vld [vmem:[%s363 + $0x8] sm:$0xff]
        %640 = vxpose.xlu0.b32.start [1/16] %v638, 128
        %641 = vxpose.xlu0.b32.cont [2/16] 0.0, 128
        %642 = vxpose.xlu0.b32.cont [3/16] 0.0, 128
        %643 = vxpose.xlu0.b32.cont [4/16] 0.0, 128
        %644 = vxpose.xlu0.b32.cont [5/16] 0.0, 128
        %645 = vxpose.xlu0.b32.cont [6/16] 0.0, 128
        %646 = vxpose.xlu0.b32.cont [7/16] 0.0, 128
        %647 = vxpose.xlu0.b32.cont [8/16] 0.0, 128
        %648 = vxpose.xlu0.b32.cont [9/16] 0.0, 128
        %649 = vxpose.xlu0.b32.cont [10/16] 0.0, 128
        %650 = vxpose.xlu0.b32.cont [11/16] 0.0, 128
        %651 = vxpose.xlu0.b32.cont [12/16] 0.0, 128
        %652 = vxpose.xlu0.b32.cont [13/16] 0.0, 128
        %653 = vxpose.xlu0.b32.cont [14/16] 0.0, 128
        %654 = vxpose.xlu0.b32.cont [15/16] 0.0, 128
        %655 = vxpose.xlu0.b32.end [16/16] 0.0, 128
        %v656 = vpop.trf.xlu0
        %v657 = vpop.trf.xlu0
        %v658 = vpop.trf.xlu0
        %v659 = vpop.trf.xlu0
        %v660 = vpop.trf.xlu0
        %v661 = vpop.trf.xlu0
        %v662 = vpop.trf.xlu0
        %v663 = vpop.trf.xlu0
        %v664 = vpop.trf.xlu0
        %v665 = vpop.trf.xlu0
        %v666 = vpop.trf.xlu0
        %v667 = vpop.trf.xlu0
        %v668 = vpop.trf.xlu0
        %v669 = vpop.trf.xlu0
        %v670 = vpop.trf.xlu0
        %v671 = vpop.trf.xlu0
        %672 = vxpose.xlu0.b32.start [1/16] %v639, 128
        %673 = vxpose.xlu0.b32.cont [2/16] 0.0, 128
        %674 = vxpose.xlu0.b32.cont [3/16] 0.0, 128
        %675 = vxpose.xlu0.b32.cont [4/16] 0.0, 128
        %676 = vxpose.xlu0.b32.cont [5/16] 0.0, 128
        %677 = vxpose.xlu0.b32.cont [6/16] 0.0, 128
        %678 = vxpose.xlu0.b32.cont [7/16] 0.0, 128
        %679 = vxpose.xlu0.b32.cont [8/16] 0.0, 128
        %680 = vxpose.xlu0.b32.cont [9/16] 0.0, 128
        %681 = vxpose.xlu0.b32.cont [10/16] 0.0, 128
        %682 = vxpose.xlu0.b32.cont [11/16] 0.0, 128
        %683 = vxpose.xlu0.b32.cont [12/16] 0.0, 128
        %684 = vxpose.xlu0.b32.cont [13/16] 0.0, 128
        %685 = vxpose.xlu0.b32.cont [14/16] 0.0, 128
        %686 = vxpose.xlu0.b32.cont [15/16] 0.0, 128
        %687 = vxpose.xlu0.b32.end [16/16] 0.0, 128
        %v688 = vpop.trf.xlu0
        %v689 = vpop.trf.xlu0
        %v690 = vpop.trf.xlu0
        %v691 = vpop.trf.xlu0
        %v692 = vpop.trf.xlu0
        %v693 = vpop.trf.xlu0
        %v694 = vpop.trf.xlu0
        %v695 = vpop.trf.xlu0
        %v696 = vpop.trf.xlu0
        %v697 = vpop.trf.xlu0
        %v698 = vpop.trf.xlu0
        %v699 = vpop.trf.xlu0
        %v700 = vpop.trf.xlu0
        %v701 = vpop.trf.xlu0
        %v702 = vpop.trf.xlu0
        %v703 = vpop.trf.xlu0
        %s704 = scalar_lea.vmem %s253, 256
        %705 = vst.msk [vmem:[%s704] sm:$0xff] %vm507, %v656
        %706 = vst.msk [vmem:[%s704 + $0x8] sm:$0xff] %vm507, %v657
        %707 = vst.msk [vmem:[%s704 + $0x10] sm:$0xff] %vm507, %v658
        %708 = vst.msk [vmem:[%s704 + $0x18] sm:$0xff] %vm507, %v659
        %709 = vst.msk [vmem:[%s704 + $0x20] sm:$0xff] %vm507, %v660
        %710 = vst.msk [vmem:[%s704 + $0x28] sm:$0xff] %vm507, %v661
        %711 = vst.msk [vmem:[%s704 + $0x30] sm:$0xff] %vm507, %v662
        %712 = vst.msk [vmem:[%s704 + $0x38] sm:$0xff] %vm507, %v663
        %713 = vst.msk [vmem:[%s704 + $0x40] sm:$0xff] %vm507, %v664
        %714 = vst.msk [vmem:[%s704 + $0x48] sm:$0xff] %vm507, %v665
        %715 = vst.msk [vmem:[%s704 + $0x50] sm:$0xff] %vm507, %v666
        %716 = vst.msk [vmem:[%s704 + $0x58] sm:$0xff] %vm507, %v667
        %717 = vst.msk [vmem:[%s704 + $0x60] sm:$0xff] %vm507, %v668
        %718 = vst.msk [vmem:[%s704 + $0x68] sm:$0xff] %vm507, %v669
        %719 = vst.msk [vmem:[%s704 + $0x70] sm:$0xff] %vm507, %v670
        %720 = vst.msk [vmem:[%s704 + $0x78] sm:$0xff] %vm507, %v671
        %721 = vst.msk [vmem:[%s704 + $0x80] sm:$0xff] %vm507, %v688
        %722 = vst.msk [vmem:[%s704 + $0x88] sm:$0xff] %vm507, %v689
        %723 = vst.msk [vmem:[%s704 + $0x90] sm:$0xff] %vm507, %v690
        %724 = vst.msk [vmem:[%s704 + $0x98] sm:$0xff] %vm507, %v691
        %725 = vst.msk [vmem:[%s704 + $0xa0] sm:$0xff] %vm507, %v692
        %726 = vst.msk [vmem:[%s704 + $0xa8] sm:$0xff] %vm507, %v693
        %727 = vst.msk [vmem:[%s704 + $0xb0] sm:$0xff] %vm507, %v694
        %728 = vst.msk [vmem:[%s704 + $0xb8] sm:$0xff] %vm507, %v695
        %729 = vst.msk [vmem:[%s704 + $0xc0] sm:$0xff] %vm507, %v696
        %730 = vst.msk [vmem:[%s704 + $0xc8] sm:$0xff] %vm507, %v697
        %731 = vst.msk [vmem:[%s704 + $0xd0] sm:$0xff] %vm507, %v698
        %732 = vst.msk [vmem:[%s704 + $0xd8] sm:$0xff] %vm507, %v699
        %733 = vst.msk [vmem:[%s704 + $0xe0] sm:$0xff] %vm507, %v700
        %734 = vst.msk [vmem:[%s704 + $0xe8] sm:$0xff] %vm507, %v701
        %735 = vst.msk [vmem:[%s704 + $0xf0] sm:$0xff] %vm507, %v702
        %736 = vst.msk [vmem:[%s704 + $0xf8] sm:$0xff] %vm507, %v703
        %v737 = vld [vmem:[%s357] sm:$0xff]
        %v738 = vld [vmem:[%s357 + $0x8] sm:$0xff]
        %739 = vxpose.xlu0.b32.start [1/16] %v737, 128
        %740 = vxpose.xlu0.b32.cont [2/16] 0.0, 128
        %741 = vxpose.xlu0.b32.cont [3/16] 0.0, 128
        %742 = vxpose.xlu0.b32.cont [4/16] 0.0, 128
        %743 = vxpose.xlu0.b32.cont [5/16] 0.0, 128
        %744 = vxpose.xlu0.b32.cont [6/16] 0.0, 128
        %745 = vxpose.xlu0.b32.cont [7/16] 0.0, 128
        %746 = vxpose.xlu0.b32.cont [8/16] 0.0, 128
        %747 = vxpose.xlu0.b32.cont [9/16] 0.0, 128
        %748 = vxpose.xlu0.b32.cont [10/16] 0.0, 128
        %749 = vxpose.xlu0.b32.cont [11/16] 0.0, 128
        %750 = vxpose.xlu0.b32.cont [12/16] 0.0, 128
        %751 = vxpose.xlu0.b32.cont [13/16] 0.0, 128
        %752 = vxpose.xlu0.b32.cont [14/16] 0.0, 128
        %753 = vxpose.xlu0.b32.cont [15/16] 0.0, 128
        %754 = vxpose.xlu0.b32.end [16/16] 0.0, 128
        %v755 = vpop.trf.xlu0
        %v756 = vpop.trf.xlu0
        %v757 = vpop.trf.xlu0
        %v758 = vpop.trf.xlu0
        %v759 = vpop.trf.xlu0
        %v760 = vpop.trf.xlu0
        %v761 = vpop.trf.xlu0
        %v762 = vpop.trf.xlu0
        %v763 = vpop.trf.xlu0
        %v764 = vpop.trf.xlu0
        %v765 = vpop.trf.xlu0
        %v766 = vpop.trf.xlu0
        %v767 = vpop.trf.xlu0
        %v768 = vpop.trf.xlu0
        %v769 = vpop.trf.xlu0
        %v770 = vpop.trf.xlu0
        %771 = vxpose.xlu0.b32.start [1/16] %v738, 128
        %772 = vxpose.xlu0.b32.cont [2/16] 0.0, 128
        %773 = vxpose.xlu0.b32.cont [3/16] 0.0, 128
        %774 = vxpose.xlu0.b32.cont [4/16] 0.0, 128
        %775 = vxpose.xlu0.b32.cont [5/16] 0.0, 128
        %776 = vxpose.xlu0.b32.cont [6/16] 0.0, 128
        %777 = vxpose.xlu0.b32.cont [7/16] 0.0, 128
        %778 = vxpose.xlu0.b32.cont [8/16] 0.0, 128
        %779 = vxpose.xlu0.b32.cont [9/16] 0.0, 128
        %780 = vxpose.xlu0.b32.cont [10/16] 0.0, 128
        %781 = vxpose.xlu0.b32.cont [11/16] 0.0, 128
        %782 = vxpose.xlu0.b32.cont [12/16] 0.0, 128
        %783 = vxpose.xlu0.b32.cont [13/16] 0.0, 128
        %784 = vxpose.xlu0.b32.cont [14/16] 0.0, 128
        %785 = vxpose.xlu0.b32.cont [15/16] 0.0, 128
        %786 = vxpose.xlu0.b32.end [16/16] 0.0, 128
        %v787 = vpop.trf.xlu0
        %v788 = vpop.trf.xlu0
        %v789 = vpop.trf.xlu0
        %v790 = vpop.trf.xlu0
        %v791 = vpop.trf.xlu0
        %v792 = vpop.trf.xlu0
        %v793 = vpop.trf.xlu0
        %v794 = vpop.trf.xlu0
        %v795 = vpop.trf.xlu0
        %v796 = vpop.trf.xlu0
        %v797 = vpop.trf.xlu0
        %v798 = vpop.trf.xlu0
        %v799 = vpop.trf.xlu0
        %v800 = vpop.trf.xlu0
        %v801 = vpop.trf.xlu0
        %v802 = vpop.trf.xlu0
        %s803 = scalar_lea.vmem %s263, 256
        %804 = vst.msk [vmem:[%s803] sm:$0xff] %vm507, %v755
        %805 = vst.msk [vmem:[%s803 + $0x8] sm:$0xff] %vm507, %v756
        %806 = vst.msk [vmem:[%s803 + $0x10] sm:$0xff] %vm507, %v757
        %807 = vst.msk [vmem:[%s803 + $0x18] sm:$0xff] %vm507, %v758
        %808 = vst.msk [vmem:[%s803 + $0x20] sm:$0xff] %vm507, %v759
        %809 = vst.msk [vmem:[%s803 + $0x28] sm:$0xff] %vm507, %v760
        %810 = vst.msk [vmem:[%s803 + $0x30] sm:$0xff] %vm507, %v761
        %811 = vst.msk [vmem:[%s803 + $0x38] sm:$0xff] %vm507, %v762
        %812 = vst.msk [vmem:[%s803 + $0x40] sm:$0xff] %vm507, %v763
        %813 = vst.msk [vmem:[%s803 + $0x48] sm:$0xff] %vm507, %v764
        %814 = vst.msk [vmem:[%s803 + $0x50] sm:$0xff] %vm507, %v765
        %815 = vst.msk [vmem:[%s803 + $0x58] sm:$0xff] %vm507, %v766
        %816 = vst.msk [vmem:[%s803 + $0x60] sm:$0xff] %vm507, %v767
        %817 = vst.msk [vmem:[%s803 + $0x68] sm:$0xff] %vm507, %v768
        %818 = vst.msk [vmem:[%s803 + $0x70] sm:$0xff] %vm507, %v769
        %819 = vst.msk [vmem:[%s803 + $0x78] sm:$0xff] %vm507, %v770
        %820 = vst.msk [vmem:[%s803 + $0x80] sm:$0xff] %vm507, %v787
        %821 = vst.msk [vmem:[%s803 + $0x88] sm:$0xff] %vm507, %v788
        %822 = vst.msk [vmem:[%s803 + $0x90] sm:$0xff] %vm507, %v789
        %823 = vst.msk [vmem:[%s803 + $0x98] sm:$0xff] %vm507, %v790
        %824 = vst.msk [vmem:[%s803 + $0xa0] sm:$0xff] %vm507, %v791
        %825 = vst.msk [vmem:[%s803 + $0xa8] sm:$0xff] %vm507, %v792
        %826 = vst.msk [vmem:[%s803 + $0xb0] sm:$0xff] %vm507, %v793
        %827 = vst.msk [vmem:[%s803 + $0xb8] sm:$0xff] %vm507, %v794
        %828 = vst.msk [vmem:[%s803 + $0xc0] sm:$0xff] %vm507, %v795
        %829 = vst.msk [vmem:[%s803 + $0xc8] sm:$0xff] %vm507, %v796
        %830 = vst.msk [vmem:[%s803 + $0xd0] sm:$0xff] %vm507, %v797
        %831 = vst.msk [vmem:[%s803 + $0xd8] sm:$0xff] %vm507, %v798
        %832 = vst.msk [vmem:[%s803 + $0xe0] sm:$0xff] %vm507, %v799
        %833 = vst.msk [vmem:[%s803 + $0xe8] sm:$0xff] %vm507, %v800
        %834 = vst.msk [vmem:[%s803 + $0xf0] sm:$0xff] %vm507, %v801
        %835 = vst.msk [vmem:[%s803 + $0xf8] sm:$0xff] %vm507, %v802
        %v836 = vld [vmem:[%s381] sm:$0xff]
        %v837 = vld [vmem:[%s381 + $0x8] sm:$0xff]
        %838 = vxpose.xlu0.b32.start [1/16] %v836, 128
        %839 = vxpose.xlu0.b32.cont [2/16] 0.0, 128
        %840 = vxpose.xlu0.b32.cont [3/16] 0.0, 128
        %841 = vxpose.xlu0.b32.cont [4/16] 0.0, 128
        %842 = vxpose.xlu0.b32.cont [5/16] 0.0, 128
        %843 = vxpose.xlu0.b32.cont [6/16] 0.0, 128
        %844 = vxpose.xlu0.b32.cont [7/16] 0.0, 128
        %845 = vxpose.xlu0.b32.cont [8/16] 0.0, 128
        %846 = vxpose.xlu0.b32.cont [9/16] 0.0, 128
        %847 = vxpose.xlu0.b32.cont [10/16] 0.0, 128
        %848 = vxpose.xlu0.b32.cont [11/16] 0.0, 128
        %849 = vxpose.xlu0.b32.cont [12/16] 0.0, 128
        %850 = vxpose.xlu0.b32.cont [13/16] 0.0, 128
        %851 = vxpose.xlu0.b32.cont [14/16] 0.0, 128
        %852 = vxpose.xlu0.b32.cont [15/16] 0.0, 128
        %853 = vxpose.xlu0.b32.end [16/16] 0.0, 128
        %v854 = vpop.trf.xlu0
        %v855 = vpop.trf.xlu0
        %v856 = vpop.trf.xlu0
        %v857 = vpop.trf.xlu0
        %v858 = vpop.trf.xlu0
        %v859 = vpop.trf.xlu0
        %v860 = vpop.trf.xlu0
        %v861 = vpop.trf.xlu0
        %v862 = vpop.trf.xlu0
        %v863 = vpop.trf.xlu0
        %v864 = vpop.trf.xlu0
        %v865 = vpop.trf.xlu0
        %v866 = vpop.trf.xlu0
        %v867 = vpop.trf.xlu0
        %v868 = vpop.trf.xlu0
        %v869 = vpop.trf.xlu0
        %870 = vxpose.xlu0.b32.start [1/16] %v837, 128
        %871 = vxpose.xlu0.b32.cont [2/16] 0.0, 128
        %872 = vxpose.xlu0.b32.cont [3/16] 0.0, 128
        %873 = vxpose.xlu0.b32.cont [4/16] 0.0, 128
        %874 = vxpose.xlu0.b32.cont [5/16] 0.0, 128
        %875 = vxpose.xlu0.b32.cont [6/16] 0.0, 128
        %876 = vxpose.xlu0.b32.cont [7/16] 0.0, 128
        %877 = vxpose.xlu0.b32.cont [8/16] 0.0, 128
        %878 = vxpose.xlu0.b32.cont [9/16] 0.0, 128
        %879 = vxpose.xlu0.b32.cont [10/16] 0.0, 128
        %880 = vxpose.xlu0.b32.cont [11/16] 0.0, 128
        %881 = vxpose.xlu0.b32.cont [12/16] 0.0, 128
        %882 = vxpose.xlu0.b32.cont [13/16] 0.0, 128
        %883 = vxpose.xlu0.b32.cont [14/16] 0.0, 128
        %884 = vxpose.xlu0.b32.cont [15/16] 0.0, 128
        %885 = vxpose.xlu0.b32.end [16/16] 0.0, 128
        %v886 = vpop.trf.xlu0
        %v887 = vpop.trf.xlu0
        %v888 = vpop.trf.xlu0
        %v889 = vpop.trf.xlu0
        %v890 = vpop.trf.xlu0
        %v891 = vpop.trf.xlu0
        %v892 = vpop.trf.xlu0
        %v893 = vpop.trf.xlu0
        %v894 = vpop.trf.xlu0
        %v895 = vpop.trf.xlu0
        %v896 = vpop.trf.xlu0
        %v897 = vpop.trf.xlu0
        %v898 = vpop.trf.xlu0
        %v899 = vpop.trf.xlu0
        %v900 = vpop.trf.xlu0
        %v901 = vpop.trf.xlu0
        %s902 = scalar_lea.vmem %s253, 512
        %903 = vst.msk [vmem:[%s902] sm:$0xff] %vm507, %v854
        %904 = vst.msk [vmem:[%s902 + $0x8] sm:$0xff] %vm507, %v855
        %905 = vst.msk [vmem:[%s902 + $0x10] sm:$0xff] %vm507, %v856
        %906 = vst.msk [vmem:[%s902 + $0x18] sm:$0xff] %vm507, %v857
        %907 = vst.msk [vmem:[%s902 + $0x20] sm:$0xff] %vm507, %v858
        %908 = vst.msk [vmem:[%s902 + $0x28] sm:$0xff] %vm507, %v859
        %909 = vst.msk [vmem:[%s902 + $0x30] sm:$0xff] %vm507, %v860
        %910 = vst.msk [vmem:[%s902 + $0x38] sm:$0xff] %vm507, %v861
        %911 = vst.msk [vmem:[%s902 + $0x40] sm:$0xff] %vm507, %v862
        %912 = vst.msk [vmem:[%s902 + $0x48] sm:$0xff] %vm507, %v863
        %913 = vst.msk [vmem:[%s902 + $0x50] sm:$0xff] %vm507, %v864
        %914 = vst.msk [vmem:[%s902 + $0x58] sm:$0xff] %vm507, %v865
        %915 = vst.msk [vmem:[%s902 + $0x60] sm:$0xff] %vm507, %v866
        %916 = vst.msk [vmem:[%s902 + $0x68] sm:$0xff] %vm507, %v867
        %917 = vst.msk [vmem:[%s902 + $0x70] sm:$0xff] %vm507, %v868
        %918 = vst.msk [vmem:[%s902 + $0x78] sm:$0xff] %vm507, %v869
        %919 = vst.msk [vmem:[%s902 + $0x80] sm:$0xff] %vm507, %v886
        %920 = vst.msk [vmem:[%s902 + $0x88] sm:$0xff] %vm507, %v887
        %921 = vst.msk [vmem:[%s902 + $0x90] sm:$0xff] %vm507, %v888
        %922 = vst.msk [vmem:[%s902 + $0x98] sm:$0xff] %vm507, %v889
        %923 = vst.msk [vmem:[%s902 + $0xa0] sm:$0xff] %vm507, %v890
        %924 = vst.msk [vmem:[%s902 + $0xa8] sm:$0xff] %vm507, %v891
        %925 = vst.msk [vmem:[%s902 + $0xb0] sm:$0xff] %vm507, %v892
        %926 = vst.msk [vmem:[%s902 + $0xb8] sm:$0xff] %vm507, %v893
        %927 = vst.msk [vmem:[%s902 + $0xc0] sm:$0xff] %vm507, %v894
        %928 = vst.msk [vmem:[%s902 + $0xc8] sm:$0xff] %vm507, %v895
        %929 = vst.msk [vmem:[%s902 + $0xd0] sm:$0xff] %vm507, %v896
        %930 = vst.msk [vmem:[%s902 + $0xd8] sm:$0xff] %vm507, %v897
        %931 = vst.msk [vmem:[%s902 + $0xe0] sm:$0xff] %vm507, %v898
        %932 = vst.msk [vmem:[%s902 + $0xe8] sm:$0xff] %vm507, %v899
        %933 = vst.msk [vmem:[%s902 + $0xf0] sm:$0xff] %vm507, %v900
        %934 = vst.msk [vmem:[%s902 + $0xf8] sm:$0xff] %vm507, %v901
        %v935 = vld [vmem:[%s375] sm:$0xff]
        %v936 = vld [vmem:[%s375 + $0x8] sm:$0xff]
        %937 = vxpose.xlu0.b32.start [1/16] %v935, 128
        %938 = vxpose.xlu0.b32.cont [2/16] 0.0, 128
        %939 = vxpose.xlu0.b32.cont [3/16] 0.0, 128
        %940 = vxpose.xlu0.b32.cont [4/16] 0.0, 128
        %941 = vxpose.xlu0.b32.cont [5/16] 0.0, 128
        %942 = vxpose.xlu0.b32.cont [6/16] 0.0, 128
        %943 = vxpose.xlu0.b32.cont [7/16] 0.0, 128
        %944 = vxpose.xlu0.b32.cont [8/16] 0.0, 128
        %945 = vxpose.xlu0.b32.cont [9/16] 0.0, 128
        %946 = vxpose.xlu0.b32.cont [10/16] 0.0, 128
        %947 = vxpose.xlu0.b32.cont [11/16] 0.0, 128
        %948 = vxpose.xlu0.b32.cont [12/16] 0.0, 128
        %949 = vxpose.xlu0.b32.cont [13/16] 0.0, 128
        %950 = vxpose.xlu0.b32.cont [14/16] 0.0, 128
        %951 = vxpose.xlu0.b32.cont [15/16] 0.0, 128
        %952 = vxpose.xlu0.b32.end [16/16] 0.0, 128
        %v953 = vpop.trf.xlu0
        %v954 = vpop.trf.xlu0
        %v955 = vpop.trf.xlu0
        %v956 = vpop.trf.xlu0
        %v957 = vpop.trf.xlu0
        %v958 = vpop.trf.xlu0
        %v959 = vpop.trf.xlu0
        %v960 = vpop.trf.xlu0
        %v961 = vpop.trf.xlu0
        %v962 = vpop.trf.xlu0
        %v963 = vpop.trf.xlu0
        %v964 = vpop.trf.xlu0
        %v965 = vpop.trf.xlu0
        %v966 = vpop.trf.xlu0
        %v967 = vpop.trf.xlu0
        %v968 = vpop.trf.xlu0
        %969 = vxpose.xlu0.b32.start [1/16] %v936, 128
        %970 = vxpose.xlu0.b32.cont [2/16] 0.0, 128
        %971 = vxpose.xlu0.b32.cont [3/16] 0.0, 128
        %972 = vxpose.xlu0.b32.cont [4/16] 0.0, 128
        %973 = vxpose.xlu0.b32.cont [5/16] 0.0, 128
        %974 = vxpose.xlu0.b32.cont [6/16] 0.0, 128
        %975 = vxpose.xlu0.b32.cont [7/16] 0.0, 128
        %976 = vxpose.xlu0.b32.cont [8/16] 0.0, 128
        %977 = vxpose.xlu0.b32.cont [9/16] 0.0, 128
        %978 = vxpose.xlu0.b32.cont [10/16] 0.0, 128
        %979 = vxpose.xlu0.b32.cont [11/16] 0.0, 128
        %980 = vxpose.xlu0.b32.cont [12/16] 0.0, 128
        %981 = vxpose.xlu0.b32.cont [13/16] 0.0, 128
        %982 = vxpose.xlu0.b32.cont [14/16] 0.0, 128
        %983 = vxpose.xlu0.b32.cont [15/16] 0.0, 128
        %984 = vxpose.xlu0.b32.end [16/16] 0.0, 128
        %v985 = vpop.trf.xlu0
        %v986 = vpop.trf.xlu0
        %v987 = vpop.trf.xlu0
        %v988 = vpop.trf.xlu0
        %v989 = vpop.trf.xlu0
        %v990 = vpop.trf.xlu0
        %v991 = vpop.trf.xlu0
        %v992 = vpop.trf.xlu0
        %v993 = vpop.trf.xlu0
        %v994 = vpop.trf.xlu0
        %v995 = vpop.trf.xlu0
        %v996 = vpop.trf.xlu0
        %v997 = vpop.trf.xlu0
        %v998 = vpop.trf.xlu0
        %v999 = vpop.trf.xlu0
        %v1000 = vpop.trf.xlu0
        %s1001 = scalar_lea.vmem %s263, 512
        %1002 = vst.msk [vmem:[%s1001] sm:$0xff] %vm507, %v953
        %1003 = vst.msk [vmem:[%s1001 + $0x8] sm:$0xff] %vm507, %v954
        %1004 = vst.msk [vmem:[%s1001 + $0x10] sm:$0xff] %vm507, %v955
        %1005 = vst.msk [vmem:[%s1001 + $0x18] sm:$0xff] %vm507, %v956
        %1006 = vst.msk [vmem:[%s1001 + $0x20] sm:$0xff] %vm507, %v957
        %1007 = vst.msk [vmem:[%s1001 + $0x28] sm:$0xff] %vm507, %v958
        %1008 = vst.msk [vmem:[%s1001 + $0x30] sm:$0xff] %vm507, %v959
        %1009 = vst.msk [vmem:[%s1001 + $0x38] sm:$0xff] %vm507, %v960
        %1010 = vst.msk [vmem:[%s1001 + $0x40] sm:$0xff] %vm507, %v961
        %1011 = vst.msk [vmem:[%s1001 + $0x48] sm:$0xff] %vm507, %v962
        %1012 = vst.msk [vmem:[%s1001 + $0x50] sm:$0xff] %vm507, %v963
        %1013 = vst.msk [vmem:[%s1001 + $0x58] sm:$0xff] %vm507, %v964
        %1014 = vst.msk [vmem:[%s1001 + $0x60] sm:$0xff] %vm507, %v965
        %1015 = vst.msk [vmem:[%s1001 + $0x68] sm:$0xff] %vm507, %v966
        %1016 = vst.msk [vmem:[%s1001 + $0x70] sm:$0xff] %vm507, %v967
        %1017 = vst.msk [vmem:[%s1001 + $0x78] sm:$0xff] %vm507, %v968
        %1018 = vst.msk [vmem:[%s1001 + $0x80] sm:$0xff] %vm507, %v985
        %1019 = vst.msk [vmem:[%s1001 + $0x88] sm:$0xff] %vm507, %v986
        %1020 = vst.msk [vmem:[%s1001 + $0x90] sm:$0xff] %vm507, %v987
        %1021 = vst.msk [vmem:[%s1001 + $0x98] sm:$0xff] %vm507, %v988
        %1022 = vst.msk [vmem:[%s1001 + $0xa0] sm:$0xff] %vm507, %v989
        %1023 = vst.msk [vmem:[%s1001 + $0xa8] sm:$0xff] %vm507, %v990
        %1024 = vst.msk [vmem:[%s1001 + $0xb0] sm:$0xff] %vm507, %v991
        %1025 = vst.msk [vmem:[%s1001 + $0xb8] sm:$0xff] %vm507, %v992
        %1026 = vst.msk [vmem:[%s1001 + $0xc0] sm:$0xff] %vm507, %v993
        %1027 = vst.msk [vmem:[%s1001 + $0xc8] sm:$0xff] %vm507, %v994
        %1028 = vst.msk [vmem:[%s1001 + $0xd0] sm:$0xff] %vm507, %v995
        %1029 = vst.msk [vmem:[%s1001 + $0xd8] sm:$0xff] %vm507, %v996
        %1030 = vst.msk [vmem:[%s1001 + $0xe0] sm:$0xff] %vm507, %v997
        %1031 = vst.msk [vmem:[%s1001 + $0xe8] sm:$0xff] %vm507, %v998
        %1032 = vst.msk [vmem:[%s1001 + $0xf0] sm:$0xff] %vm507, %v999
        %1033 = vst.msk [vmem:[%s1001 + $0xf8] sm:$0xff] %vm507, %v1000
        %s1034 = smul.u32 32, %s24
        %p1035 = scmp.lt.s32.totalorder %s23, 1
        %s1036 = scalar_select %p1035, %s23, 1
        %p1037 = scmp.lt.s32.totalorder %s1034, 31
        %s1038 = scalar_select %p1037, %s1034, 31
        %s1039 = smul.addr %s1036, 96
        %s1040 = sadd.s32 %s1038, %s1039
        %s1041 = smul.addr %s1040, 8
        %s1042 = scalar_lea.vmem %s2, %s1041
        %s1043 = smul.u32 32, %s24
        %p1044 = scmp.lt.s32.totalorder %s23, 1
        %s1045 = scalar_select %p1044, %s23, 1
        %p1046 = scmp.lt.s32.totalorder %s1043, 31
        %s1047 = scalar_select %p1046, %s1043, 31
        %s1048 = smul.addr %s1045, 96
        %s1049 = sadd.s32 %s1047, %s1048
        %s1050 = smul.addr %s1049, 8
        %s1051 = scalar_lea.vmem %s3, %s1050
        // Predicated region
        $region37: #{tpu_custom_call.1} parent=27 // pred_check
          %p1052 = pneg %p105
        $region38: #{tpu_custom_call.1} parent=27 // pred_check_branch
          %1054 = sbr.rel (%p1052) target = $region40
        $region39: #{tpu_custom_call.1} parent=27 // pred_region
          %s1055 = smul.u32 32, %s24
        $region40: #{tpu_custom_call.1} parent=27 // pred_fallthru
          _
        // Predicated region
        $region41: #{tpu_custom_call.1} parent=27 // pred_check
          %p1056 = pneg %p133
        $region42: #{tpu_custom_call.1} parent=27 // pred_check_branch
          %1058 = sbr.rel (%p1056) target = $region44
        $region43: #{tpu_custom_call.1} parent=27 // pred_region
          %s1059 = smul.u32 32, %s24
        $region44: #{tpu_custom_call.1} parent=27 // pred_fallthru
          _
      $region28: #{tpu_custom_call.1} parent=5 // pred_fallthru
        _
      %p1060 = scmp.le.s32.totalorder 2, %s14
      // Predicated region
      $region45: #{tpu_custom_call.1} parent=5 // pred_check
        %p1061 = pneg %p1060
      $region46: #{tpu_custom_call.1} parent=5 // pred_check_branch
        %1063 = sbr.rel (%p1061) target = $region48
      $region47: #{tpu_custom_call.1} parent=5 // pred_region
        %s1064 = ssub.s32 %s14, 2
        // Predicated region
        $region49: #{tpu_custom_call.1} parent=47 // pred_check
          %p1065 = pneg %p111
        $region50: #{tpu_custom_call.1} parent=47 // pred_check_branch
          %1067 = sbr.rel (%p1065) target = $region52
        $region51: #{tpu_custom_call.1} parent=47 // pred_region
          %s1068 = smul.u32 32, %s26
          %p1069 = scmp.lt.s32.totalorder %s25, 1
          %s1070 = scalar_select %p1069, %s25, 1
          %p1071 = scmp.lt.s32.totalorder %s1068, 31
          %s1072 = scalar_select %p1071, %s1068, 31
          %s1073 = smul.addr %s1070, 96
          %s1074 = sadd.s32 %s1072, %s1073
          %s1075 = smul.addr %s1074, 8
          %s1076 = scalar_lea.vmem %s2, %s1075
        $region52: #{tpu_custom_call.1} parent=47 // pred_fallthru
          _
        // Predicated region
        $region53: #{tpu_custom_call.1} parent=47 // pred_check
          %p1077 = pneg %p139
        $region54: #{tpu_custom_call.1} parent=47 // pred_check_branch
          %1079 = sbr.rel (%p1077) target = $region56
        $region55: #{tpu_custom_call.1} parent=47 // pred_region
          %s1080 = smul.u32 32, %s26
          %p1081 = scmp.lt.s32.totalorder %s25, 1
          %s1082 = scalar_select %p1081, %s25, 1
          %p1083 = scmp.lt.s32.totalorder %s1080, 31
          %s1084 = scalar_select %p1083, %s1080, 31
          %s1085 = smul.addr %s1082, 96
          %s1086 = sadd.s32 %s1084, %s1085
          %s1087 = smul.addr %s1086, 8
          %s1088 = scalar_lea.vmem %s3, %s1087
        $region56: #{tpu_custom_call.1} parent=47 // pred_fallthru
          _
      $region48: #{tpu_custom_call.1} parent=5 // pred_fallthru
        _
    $region6: #{tpu_custom_call.1} parent=1 // loop_footer
      %s18 = sadd.s32 1, %s14
    $region7: #{tpu_custom_call.1} parent=1 // loop_footer_branch
      %13 = sbr.rel target = $region3
    $region8: #{tpu_custom_call.1} parent=1 // loop_exit
      _
    %1089 = vsyncpa [#allocation4], 1
    %s1090 = scalar_lea.sflag [#allocation4], 1
    %1091 = vsyncpa %s1090, 1
    %1092 = vsyncpa [#allocation6], 1
    %s1093 = scalar_lea.sflag [#allocation6], 1
    %1094 = vsyncpa %s1093, 1

</llo_original>
